<compile_context>
chip_gen: v5e
topology: v5e:2x2
jax: 0.10.0
libtpu: 0.0.40
codegen_flags: <defaults>
</compile_context>

<pallas_src>
import math
import functools

import jax
import jax.numpy as jnp
from jax.experimental import pallas as pl
from jax.experimental.pallas import tpu as pltpu

LN_EPS = 1e-5
LANE = 128

LAYER_KEYS = ["g1", "b1", "wqkv", "bqkv", "wo", "bo",
              "g2", "b2", "w1", "bb1", "w2", "bb2"]


# ----------------------------- small helpers --------------------------------

def _round_up(x, m):
    return ((x + m - 1) // m) * m


def _pick_tile(total, candidates):
    for c in candidates:
        if total % c == 0:
            return c
    return total


def _pad_to(a, shape):
    """Zero-pad array `a` up to `shape` (same rank)."""
    if tuple(a.shape) == tuple(shape):
        return a
    out = jnp.zeros(shape, a.dtype)
    return out.at[tuple(slice(0, s) for s in a.shape)].set(a)


def _block_bytes(a, block_shape=None):
    shp = block_shape if block_shape is not None else a.shape
    return int(math.prod(shp)) * a.dtype.itemsize


def _layer_norm(x, gamma, beta, d_real):
    """LayerNorm over the *real* feature width d_real of a lane-padded f32 x.

    Padded columns of x are zero, so sums over the padded row equal sums over
    the real columns; gamma/beta are zero-padded so padded outputs stay 0.
    """
    inv_d = 1.0 / d_real
    s1 = jnp.sum(x, axis=-1, keepdims=True)
    s2 = jnp.sum(x * x, axis=-1, keepdims=True)
    mu = s1 * inv_d
    var = s2 * inv_d - mu * mu
    inv = jax.lax.rsqrt(var + LN_EPS)
    return (x - mu) * inv * gamma + beta


# ------------------------------ layer-stack kernel ---------------------------

def decoder_layers_kernel(
        x0_ref, mask_ref,
        g1_ref, b1_ref, wqkv_ref, bqkv_ref, wo_ref, bo_ref,
        g2_ref, b2_ref, w1_ref, bb1_ref, w2_ref, bb2_ref,
        lng_ref, lnb_ref,
        xn_ref,
        x_sc,
        *, n_heads, d_head, attn_pad, d_model, batch_tile, seq):
    """Grid = (batch tile ["parallel"], layer ["arbitrary"]).

    Activations live in the f32 VMEM scratch x_sc across the layer axis; layer
    weights are streamed (double-buffered) block-by-block.  Output is the
    final-LayerNormed activations (the vocab projection runs in its own kernel
    so out_w / logits never occupy VMEM here).
    """
    l = pl.program_id(1)

    @pl.when(l == 0)
    def _init():
        x_sc[...] = x0_ref[...]                     # (tm, Dp) f32, padded cols 0

    x = x_sc[...]

    # additive causal mask, broadcast ONCE per layer (not once per head)
    mask_b = jnp.broadcast_to(mask_ref[...][None, :, :],
                              (batch_tile, seq, seq))

    # ---------- pre-LN multi-head self-attention + residual ------------------
    xn = _layer_norm(x, g1_ref[0], b1_ref[0], d_model)
    # ONE fused lane-dense QKV matmul (bf16 MXU operands, f32 accumulation);
    # 1/sqrt(d_head) is folded into the q slice of wqkv / bqkv by the wrapper.
    qkv = (jnp.dot(xn.astype(jnp.bfloat16), wqkv_ref[0],
                   preferred_element_type=jnp.float32) + bqkv_ref[0])

    head_outs = []
    for h in range(n_heads):                        # static unroll over heads
        lo = h * d_head
        hi = (h + 1) * d_head
        q = qkv[:, 0 * attn_pad + lo:0 * attn_pad + hi]
        k = qkv[:, 1 * attn_pad + lo:1 * attn_pad + hi]
        v = qkv[:, 2 * attn_pad + lo:2 * attn_pad + hi]
        q = q.reshape(batch_tile, seq, d_head).astype(jnp.bfloat16)
        k = k.reshape(batch_tile, seq, d_head).astype(jnp.bfloat16)
        v = v.reshape(batch_tile, seq, d_head).astype(jnp.bfloat16)
        s = jnp.einsum("bqd,bkd->bqk", q, k,
                       preferred_element_type=jnp.float32) + mask_b
        s = s - jnp.max(s, axis=-1, keepdims=True)
        p = jnp.exp(s)
        p = p * pl.reciprocal(jnp.sum(p, axis=-1, keepdims=True), approx=False)
        head_outs.append(
            jnp.einsum("bqk,bkd->bqd", p.astype(jnp.bfloat16), v,
                       preferred_element_type=jnp.float32))

    # concat heads -> ONE output-projection dot with K = n_heads*d_head
    attn = jnp.concatenate(head_outs, axis=-1)
    attn = attn.reshape(batch_tile * seq, n_heads * d_head)
    x = x + (jnp.dot(attn.astype(jnp.bfloat16), wo_ref[0],
                     preferred_element_type=jnp.float32) + bo_ref[0])

    # ---------- pre-LN position-wise FFN + residual ---------------------------
    xn2 = _layer_norm(x, g2_ref[0], b2_ref[0], d_model)
    h1 = (jnp.dot(xn2.astype(jnp.bfloat16), w1_ref[0],
                  preferred_element_type=jnp.float32) + bb1_ref[0])
    h1 = jnp.maximum(h1, 0.0)                       # ReLU
    x = x + (jnp.dot(h1.astype(jnp.bfloat16), w2_ref[0],
                     preferred_element_type=jnp.float32) + bb2_ref[0])

    x_sc[...] = x                                   # stays resident in VMEM

    # ---------- final LayerNorm fused into the last layer iteration ----------
    @pl.when(l == pl.num_programs(1) - 1)
    def _final():
        xn_ref[...] = _layer_norm(x, lng_ref[...], lnb_ref[...], d_model)


# ------------------------------ vocab-projection kernel ----------------------

def vocab_projection_kernel(xn_ref, w_ref, b_ref, out_ref):
    out_ref[...] = (jnp.dot(xn_ref[...].astype(jnp.bfloat16), w_ref[...],
                            preferred_element_type=jnp.float32) + b_ref[...])


# ------------------------------- wrappers ------------------------------------

def prepare_fused_params(params, *, d_model, d_head, n_heads):
    """Pad / stack / bf16-cast all decoder weights ONCE (at load time).

    Hoisted out of the forward pass so per-call HBM traffic is only the
    layer-weight stream the kernel actually needs.
    """
    layers = params["layers"]
    d_hidden = layers[0]["w1"].shape[1]
    vocab = params["out_w"].shape[1]
    d_attn = n_heads * d_head
    Dp = _round_up(d_model, LANE)
    Hp = _round_up(d_hidden, LANE)
    Vp = _round_up(vocab, LANE)
    Ap = _round_up(d_attn, LANE)
    scale = 1.0 / math.sqrt(d_head)

    def stack(fn):
        return jnp.stack([fn(lp) for lp in layers], axis=0)

    def wqkv(lp):
        w = jnp.concatenate([_pad_to(lp["wq"] * scale, (Dp, Ap)),
                             _pad_to(lp["wk"], (Dp, Ap)),
                             _pad_to(lp["wv"], (Dp, Ap))], axis=1)
        return w.astype(jnp.bfloat16)

    def bqkv(lp):
        return jnp.concatenate([_pad_to(lp["bq"] * scale, (1, Ap)),
                                _pad_to(lp["bk"], (1, Ap)),
                                _pad_to(lp["bv"], (1, Ap))], axis=1)

    fused = dict(
        g1=stack(lambda lp: _pad_to(lp["g1"], (1, Dp))),
        b1=stack(lambda lp: _pad_to(lp["b1"], (1, Dp))),
        wqkv=stack(wqkv),
        bqkv=stack(bqkv),
        wo=stack(lambda lp: _pad_to(lp["wo"], (d_attn, Dp)).astype(jnp.bfloat16)),
        bo=stack(lambda lp: _pad_to(lp["bo"], (1, Dp))),
        g2=stack(lambda lp: _pad_to(lp["g2"], (1, Dp))),
        b2=stack(lambda lp: _pad_to(lp["b2"], (1, Dp))),
        w1=stack(lambda lp: _pad_to(lp["w1"], (Dp, Hp)).astype(jnp.bfloat16)),
        bb1=stack(lambda lp: _pad_to(lp["bb1"], (1, Hp))),
        w2=stack(lambda lp: _pad_to(lp["w2"], (Hp, Dp)).astype(jnp.bfloat16)),
        bb2=stack(lambda lp: _pad_to(lp["bb2"], (1, Dp))),
        ln_g=_pad_to(params["ln_g"], (1, Dp)),
        ln_b=_pad_to(params["ln_b"], (1, Dp)),
        out_w=_pad_to(params["out_w"], (Dp, Vp)).astype(jnp.bfloat16),
        out_b=_pad_to(params["out_b"], (1, Vp)),
        embedding=params["embedding"],
        pe=params["pe"],
    )
    dims = dict(d_model=d_model, d_head=d_head, n_heads=n_heads,
                d_attn=d_attn, d_hidden=d_hidden, vocab=vocab,
                Dp=Dp, Hp=Hp, Vp=Vp, Ap=Ap)
    return fused, dims


def run_decoder_layers(x_pad, add_mask, fused, dims, *, batch, seq):
    N, Dp = x_pad.shape
    L = fused["wqkv"].shape[0]

    # Leading "parallel" M axis over whole batch elements (feeds both v7x TCs);
    # the layer axis is the inner "arbitrary" axis so activations stay resident.
    batch_tile = 1 if (seq % 8 == 0) else batch
    grid_m = batch // batch_tile
    tm = batch_tile * seq

    layer_args = [fused[k] for k in LAYER_KEYS]

    def layer_spec(a):
        nd = a.ndim - 1
        def imap(m, l):
            return (l,) + (0,) * nd
        return pl.BlockSpec((1,) + a.shape[1:], imap)

    def const_spec(a):
        nd = a.ndim
        def imap(m, l):
            return (0,) * nd
        return pl.BlockSpec(a.shape, imap)

    in_specs = ([pl.BlockSpec((tm, Dp), lambda m, l: (m, 0)),
                 const_spec(add_mask)]
                + [layer_spec(a) for a in layer_args]
                + [const_spec(fused["ln_g"]), const_spec(fused["ln_b"])])
    out_spec = pl.BlockSpec((tm, Dp), lambda m, l: (m, 0))

    # VMEM budget from the actual resident set: residual scratch + double-
    # buffered streamed layer weights + invariants + in/out activation blocks,
    # with headroom; capped below v7x's 64 MiB.  (The invariant blocks left in
    # this kernel are tiny now that out_w lives in the projection kernel.)
    per_layer = sum(_block_bytes(a, (1,) + a.shape[1:]) for a in layer_args)
    invariant = (_block_bytes(add_mask) + _block_bytes(fused["ln_g"])
                 + _block_bytes(fused["ln_b"]))
    act = tm * Dp * 4
    resident = 2 * per_layer + 2 * invariant + 4 * act + act
    vmem_limit = int(min(max(2 * resident + (1 << 20), 16 << 20), 60 << 20))

    kernel = functools.partial(
        decoder_layers_kernel,
        n_heads=dims["n_heads"], d_head=dims["d_head"], attn_pad=dims["Ap"],
        d_model=dims["d_model"], batch_tile=batch_tile, seq=seq)

    return pl.pallas_call(
        kernel,
        out_shape=jax.ShapeDtypeStruct((N, Dp), jnp.float32),
        grid_spec=pltpu.PrefetchScalarGridSpec(
            num_scalar_prefetch=0,
            grid=(grid_m, L),
            in_specs=in_specs,
            out_specs=out_spec,
            scratch_shapes=[pltpu.VMEM((tm, Dp), jnp.float32)],
        ),
        compiler_params=pltpu.CompilerParams(
            dimension_semantics=("parallel", "arbitrary"),
            vmem_limit_bytes=vmem_limit,
        ),
    )(x_pad, add_mask, *layer_args, fused["ln_g"], fused["ln_b"])


def run_vocab_projection(xn, out_w, out_b):
    N, Dp = xn.shape
    Vp = out_w.shape[1]
    tm = _pick_tile(N, (256, 128, 64, 32, 16, 8))
    tv = _pick_tile(Vp, (512, 256, 128))

    resident = 2 * (_block_bytes(xn, (tm, Dp)) + _block_bytes(out_w, (Dp, tv))
                    + _block_bytes(out_b, (1, tv)) + tm * tv * 4)
    vmem_limit = int(min(max(2 * resident + (1 << 20), 16 << 20), 60 << 20))

    return pl.pallas_call(
        vocab_projection_kernel,
        out_shape=jax.ShapeDtypeStruct((N, Vp), jnp.float32),
        grid_spec=pltpu.PrefetchScalarGridSpec(
            num_scalar_prefetch=0,
            grid=(N // tm, Vp // tv),
            in_specs=[pl.BlockSpec((tm, Dp), lambda m, v: (m, 0)),
                      pl.BlockSpec((Dp, tv), lambda m, v: (0, v)),
                      pl.BlockSpec((1, tv), lambda m, v: (0, v))],
            out_specs=pl.BlockSpec((tm, tv), lambda m, v: (m, v)),
        ),
        compiler_params=pltpu.CompilerParams(
            dimension_semantics=("parallel", "parallel"),
            vmem_limit_bytes=vmem_limit,
        ),
    )(xn, out_w, out_b)


def decoder_forward(tokens, mask, fused, dims):
    B, S = tokens.shape
    d_model = dims["d_model"]

    # TODO(synk): embedding gather + positional-encoding add stay in plain JAX
    # (token-indexed gather); dropout is the identity at inference.
    x = fused["embedding"][tokens] * math.sqrt(d_model)
    x = x + fused["pe"][:S][None, :, :]

    x_pad = _pad_to(x.reshape(B * S, d_model).astype(jnp.float32),
                    (B * S, dims["Dp"]))
    add_mask = jnp.where(mask > 0, 0.0, -1e9).astype(jnp.float32)

    xn_final = run_decoder_layers(x_pad, add_mask, fused, dims, batch=B, seq=S)
    logits_p = run_vocab_projection(xn_final, fused["out_w"], fused["out_b"])
    return logits_p.reshape(B, S, dims["Vp"])[:, :, :dims["vocab"]]


# --------------------------- params / glue (JAX) -----------------------------

def sinusoidal_pe(max_len, d_model):
    pos = jnp.arange(max_len, dtype=jnp.float32)[:, None]
    i = jnp.arange(0, d_model, 2, dtype=jnp.float32)
    div = jnp.exp(-math.log(10000.0) * i / d_model)
    pe = jnp.zeros((max_len, d_model), jnp.float32)
    pe = pe.at[:, 0::2].set(jnp.sin(pos * div))
    pe = pe.at[:, 1::2].set(jnp.cos(pos * div))
    return pe


def init_params(key, vocab_size, d_model, d_head, d_hidden, n_heads, n_layers,
                max_len):
    n_keys = 2 + 6 * n_layers
    keys = iter(jax.random.split(key, n_keys))

    def w(k, shape):
        return jax.random.normal(k, shape, jnp.float32) * 0.02

    d_attn = n_heads * d_head
    layers = []
    for _ in range(n_layers):
        layers.append(dict(
            g1=jnp.ones((1, d_model), jnp.float32),
            b1=jnp.zeros((1, d_model), jnp.float32),
            wq=w(next(keys), (d_model, d_attn)), bq=jnp.zeros((1, d_attn), jnp.float32),
            wk=w(next(keys), (d_model, d_attn)), bk=jnp.zeros((1, d_attn), jnp.float32),
            wv=w(next(keys), (d_model, d_attn)), bv=jnp.zeros((1, d_attn), jnp.float32),
            wo=w(next(keys), (d_attn, d_model)), bo=jnp.zeros((1, d_model), jnp.float32),
            g2=jnp.ones((1, d_model), jnp.float32),
            b2=jnp.zeros((1, d_model), jnp.float32),
            w1=w(next(keys), (d_model, d_hidden)), bb1=jnp.zeros((1, d_hidden), jnp.float32),
            w2=w(next(keys), (d_hidden, d_model)), bb2=jnp.zeros((1, d_model), jnp.float32),
        ))
    return dict(
        embedding=w(next(keys), (vocab_size, d_model)),
        pe=sinusoidal_pe(max_len, d_model),
        layers=layers,
        ln_g=jnp.ones((1, d_model), jnp.float32),
        ln_b=jnp.zeros((1, d_model), jnp.float32),
        out_w=w(next(keys), (d_model, vocab_size)),
        out_b=jnp.zeros((1, vocab_size), jnp.float32),
    )


# ---------------------------------- main -------------------------------------

if __name__ == "__main__":
    vocab_size, d_model, d_head, d_hidden = 50, 32, 16, 64
    n_heads, n_layers = 2, 2
    B, S = 2, 8

    key = jax.random.PRNGKey(0)
    kp, kt = jax.random.split(key)
    params = init_params(kp, vocab_size, d_model, d_head, d_hidden,
                         n_heads, n_layers, max_len=64)

    # Hoisted out of the forward pass: done once at load time.
    fused, dims = prepare_fused_params(params, d_model=d_model,
                                       d_head=d_head, n_heads=n_heads)
    jax.block_until_ready(fused)

    tokens = jax.random.randint(kt, (B, S), 0, vocab_size, dtype=jnp.int32)
    mask = jnp.tril(jnp.ones((S, S), jnp.float32))   # causal mask: 1 = attend

    logits = decoder_forward(tokens, mask, fused, dims)
    jax.block_until_ready(logits)

    assert logits.shape == (B, S, vocab_size), logits.shape
    assert bool(jnp.all(jnp.isfinite(logits)))
    print("KERNEL_OK")
</pallas_src>

<mosaic_0001>
module attributes {stable_mosaic.version = 11 : i64} {
  func.func @decoder_layers_kernel(%arg0: i32, %arg1: i32, %arg2: memref<8x128xf32, #tpu.memory_space<vmem>>, %arg3: memref<8x8xf32, #tpu.memory_space<vmem>>, %arg4: memref<1x1x128xf32, #tpu.memory_space<vmem>>, %arg5: memref<1x1x128xf32, #tpu.memory_space<vmem>>, %arg6: memref<1x128x384xbf16, #tpu.memory_space<vmem>>, %arg7: memref<1x1x384xf32, #tpu.memory_space<vmem>>, %arg8: memref<1x32x128xbf16, #tpu.memory_space<vmem>>, %arg9: memref<1x1x128xf32, #tpu.memory_space<vmem>>, %arg10: memref<1x1x128xf32, #tpu.memory_space<vmem>>, %arg11: memref<1x1x128xf32, #tpu.memory_space<vmem>>, %arg12: memref<1x128x128xbf16, #tpu.memory_space<vmem>>, %arg13: memref<1x1x128xf32, #tpu.memory_space<vmem>>, %arg14: memref<1x128x128xbf16, #tpu.memory_space<vmem>>, %arg15: memref<1x1x128xf32, #tpu.memory_space<vmem>>, %arg16: memref<1x128xf32, #tpu.memory_space<vmem>>, %arg17: memref<1x128xf32, #tpu.memory_space<vmem>>, %arg18: memref<8x128xf32, #tpu.memory_space<vmem>>, %arg19: memref<8x128xf32, #tpu.memory_space<vmem>>) attributes {dimension_semantics = [#tpu.dimension_semantics<parallel>, #tpu.dimension_semantics<arbitrary>], iteration_bounds = array<i64: 2, 2>, scalar_prefetch = 0 : i64, scratch_operands = 1 : i64, tpu.core_type = #tpu.core_type<tc>, window_params = [{transform_indices = @transform_0, window_bounds = array<i64: 8, 128>}, {pipeline_mode = #tpu.pipeline_mode<synchronous>, transform_indices = @transform_1, window_bounds = array<i64: 8, 8>}, {transform_indices = @transform_2, window_bounds = array<i64: 1, 1, 128>}, {transform_indices = @transform_3, window_bounds = array<i64: 1, 1, 128>}, {transform_indices = @transform_4, window_bounds = array<i64: 1, 128, 384>}, {transform_indices = @transform_5, window_bounds = array<i64: 1, 1, 384>}, {transform_indices = @transform_6, window_bounds = array<i64: 1, 32, 128>}, {transform_indices = @transform_7, window_bounds = array<i64: 1, 1, 128>}, {transform_indices = @transform_8, window_bounds = array<i64: 1, 1, 128>}, {transform_indices = @transform_9, window_bounds = array<i64: 1, 1, 128>}, {transform_indices = @transform_10, window_bounds = array<i64: 1, 128, 128>}, {transform_indices = @transform_11, window_bounds = array<i64: 1, 1, 128>}, {transform_indices = @transform_12, window_bounds = array<i64: 1, 128, 128>}, {transform_indices = @transform_13, window_bounds = array<i64: 1, 1, 128>}, {pipeline_mode = #tpu.pipeline_mode<synchronous>, transform_indices = @transform_14, window_bounds = array<i64: 1, 128>}, {pipeline_mode = #tpu.pipeline_mode<synchronous>, transform_indices = @transform_15, window_bounds = array<i64: 1, 128>}, {transform_indices = @transform_16, window_bounds = array<i64: 8, 128>}]} {
    %c0_i32 = arith.constant 0 : i32
    %0 = arith.cmpi eq, %arg1, %c0_i32 : i32
    %1 = arith.extui %0 : i1 to i32
    %c0_i32_0 = arith.constant 0 : i32
    %2 = arith.cmpi ne, %1, %c0_i32_0 : i32
    scf.if %2 {
      %c0_65 = arith.constant 0 : index
      %c0_66 = arith.constant 0 : index
      %146 = vector.load %arg2[%c0_65, %c0_66] : memref<8x128xf32, #tpu.memory_space<vmem>>, vector<8x128xf32>
      %c0_67 = arith.constant 0 : index
      %c0_68 = arith.constant 0 : index
      %147 = vector.load %arg19[%c0_67, %c0_68] : memref<8x128xf32, #tpu.memory_space<vmem>>, vector<8x128xf32>
      tpu.vector_store %arg19[%c0_67, %c0_68], %146 {strides = array<i32>} : memref<8x128xf32, #tpu.memory_space<vmem>>, vector<8x128xf32>,
    } else {
    }
    %c0 = arith.constant 0 : index
    %c0_1 = arith.constant 0 : index
    %3 = vector.load %arg19[%c0, %c0_1] : memref<8x128xf32, #tpu.memory_space<vmem>>, vector<8x128xf32>
    %c0_2 = arith.constant 0 : index
    %c0_3 = arith.constant 0 : index
    %4 = vector.load %arg3[%c0_2, %c0_3] : memref<8x8xf32, #tpu.memory_space<vmem>>, vector<8x8xf32>
    %5 = vector.shape_cast %4 : vector<8x8xf32> to vector<1x8x8xf32>
    %c0_4 = arith.constant 0 : index
    %c0_5 = arith.constant 0 : index
    %c0_6 = arith.constant 0 : index
    %6 = vector.load %arg4[%c0_4, %c0_5, %c0_6] : memref<1x1x128xf32, #tpu.memory_space<vmem>>, vector<1x1x128xf32>
    %7 = vector.shape_cast %6 : vector<1x1x128xf32> to vector<1x128xf32>
    %c0_7 = arith.constant 0 : index
    %c0_8 = arith.constant 0 : index
    %c0_9 = arith.constant 0 : index
    %8 = vector.load %arg5[%c0_7, %c0_8, %c0_9] : memref<1x1x128xf32, #tpu.memory_space<vmem>>, vector<1x1x128xf32>
    %9 = vector.shape_cast %8 : vector<1x1x128xf32> to vector<1x128xf32>
    %cst = arith.constant dense<0.000000e+00> : vector<8xf32>
    %10 = vector.multi_reduction <add>, %3, %cst [1] : vector<8x128xf32> to vector<8xf32>
    %11 = vector.shape_cast %10 : vector<8xf32> to vector<8x1xf32>
    %12 = arith.mulf %3, %3 : vector<8x128xf32>
    %cst_10 = arith.constant dense<0.000000e+00> : vector<8xf32>
    %13 = vector.multi_reduction <add>, %12, %cst_10 [1] : vector<8x128xf32> to vector<8xf32>
    %14 = vector.shape_cast %13 : vector<8xf32> to vector<8x1xf32>
    %cst_11 = arith.constant 3.125000e-02 : f32
    %15 = vector.broadcast %cst_11 : f32 to vector<8x1xf32>
    %16 = arith.mulf %11, %15 : vector<8x1xf32>
    %cst_12 = arith.constant 3.125000e-02 : f32
    %17 = vector.broadcast %cst_12 : f32 to vector<8x1xf32>
    %18 = arith.mulf %14, %17 : vector<8x1xf32>
    %19 = arith.mulf %16, %16 : vector<8x1xf32>
    %20 = arith.subf %18, %19 : vector<8x1xf32>
    %cst_13 = arith.constant 9.99999974E-6 : f32
    %21 = vector.broadcast %cst_13 : f32 to vector<8x1xf32>
    %22 = arith.addf %20, %21 : vector<8x1xf32>
    %23 = math.rsqrt %22 : vector<8x1xf32>
    %24 = vector.broadcast %16 : vector<8x1xf32> to vector<8x128xf32>
    %25 = arith.subf %3, %24 : vector<8x128xf32>
    %26 = vector.broadcast %23 : vector<8x1xf32> to vector<8x128xf32>
    %27 = arith.mulf %25, %26 : vector<8x128xf32>
    %28 = vector.broadcast %7 : vector<1x128xf32> to vector<8x128xf32>
    %29 = arith.mulf %27, %28 : vector<8x128xf32>
    %30 = vector.broadcast %9 : vector<1x128xf32> to vector<8x128xf32>
    %31 = arith.addf %29, %30 : vector<8x128xf32>
    %32 = arith.truncf %31 : vector<8x128xf32> to vector<8x128xbf16>
    %c0_14 = arith.constant 0 : index
    %c0_15 = arith.constant 0 : index
    %c0_16 = arith.constant 0 : index
    %33 = vector.load %arg6[%c0_14, %c0_15, %c0_16] : memref<1x128x384xbf16, #tpu.memory_space<vmem>>, vector<1x128x384xbf16>
    %34 = vector.shape_cast %33 : vector<1x128x384xbf16> to vector<128x384xbf16>
    %cst_17 = arith.constant dense<0.000000e+00> : vector<8x384xf32>
    %35 = tpu.matmul %32, %34, %cst_17 {dimension_numbers = #tpu.dot_dimension_numbers<[1], [0], [0], [1], [0, 0, 1, 1], [], []>} : vector<8x128xbf16>, vector<128x384xbf16>, vector<8x384xf32> -> vector<8x384xf32>
    %c0_18 = arith.constant 0 : index
    %c0_19 = arith.constant 0 : index
    %c0_20 = arith.constant 0 : index
    %36 = vector.load %arg7[%c0_18, %c0_19, %c0_20] : memref<1x1x384xf32, #tpu.memory_space<vmem>>, vector<1x1x384xf32>
    %37 = vector.shape_cast %36 : vector<1x1x384xf32> to vector<1x384xf32>
    %38 = vector.broadcast %37 : vector<1x384xf32> to vector<8x384xf32>
    %39 = arith.addf %35, %38 : vector<8x384xf32>
    %40 = vector.extract_strided_slice %39 {offsets = [0, 0], sizes = [8, 16], strides = [1, 1]} : vector<8x384xf32> to vector<8x16xf32>
    %41 = vector.extract_strided_slice %39 {offsets = [0, 128], sizes = [8, 16], strides = [1, 1]} : vector<8x384xf32> to vector<8x16xf32>
    %42 = vector.extract_strided_slice %39 {offsets = [0, 256], sizes = [8, 16], strides = [1, 1]} : vector<8x384xf32> to vector<8x16xf32>
    %43 = vector.shape_cast %40 : vector<8x16xf32> to vector<1x8x16xf32>
    %44 = arith.truncf %43 : vector<1x8x16xf32> to vector<1x8x16xbf16>
    %45 = vector.shape_cast %41 : vector<8x16xf32> to vector<1x8x16xf32>
    %46 = arith.truncf %45 : vector<1x8x16xf32> to vector<1x8x16xbf16>
    %47 = vector.shape_cast %42 : vector<8x16xf32> to vector<1x8x16xf32>
    %48 = arith.truncf %47 : vector<1x8x16xf32> to vector<1x8x16xbf16>
    "tpu.trace_start"() <{level = 10 : i32, message = "bqd,bkd->bqk"}> : () -> ()
    %cst_21 = arith.constant dense<0.000000e+00> : vector<1x8x8xf32>
    %49 = tpu.matmul %44, %46, %cst_21 {dimension_numbers = #tpu.dot_dimension_numbers<[2], [2], [1], [1], [0, 0, 0, 1, 1, 1], [0], [0]>} : vector<1x8x16xbf16>, vector<1x8x16xbf16>, vector<1x8x8xf32> -> vector<1x8x8xf32>
    "tpu.trace_stop"() : () -> ()
    %50 = arith.addf %49, %5 : vector<1x8x8xf32>
    %cst_22 = arith.constant dense<0xFF800000> : vector<1x8xf32>
    %51 = vector.multi_reduction <maximumf>, %50, %cst_22 [2] : vector<1x8x8xf32> to vector<1x8xf32>
    %52 = vector.shape_cast %51 : vector<1x8xf32> to vector<1x8x1xf32>
    %53 = vector.broadcast %52 : vector<1x8x1xf32> to vector<1x8x8xf32>
    %54 = arith.subf %50, %53 : vector<1x8x8xf32>
    %55 = math.exp %54 : vector<1x8x8xf32>
    %cst_23 = arith.constant dense<0.000000e+00> : vector<1x8xf32>
    %56 = vector.multi_reduction <add>, %55, %cst_23 [2] : vector<1x8x8xf32> to vector<1x8xf32>
    %57 = vector.shape_cast %56 : vector<1x8xf32> to vector<1x8x1xf32>
    %58 = tpu.reciprocal %57 : vector<1x8x1xf32> -> vector<1x8x1xf32>
    %59 = vector.broadcast %58 : vector<1x8x1xf32> to vector<1x8x8xf32>
    %60 = arith.mulf %55, %59 : vector<1x8x8xf32>
    %61 = arith.truncf %60 : vector<1x8x8xf32> to vector<1x8x8xbf16>
    "tpu.trace_start"() <{level = 10 : i32, message = "bqk,bkd->bqd"}> : () -> ()
    %cst_24 = arith.constant dense<0.000000e+00> : vector<1x8x16xf32>
    %62 = tpu.matmul %61, %48, %cst_24 {dimension_numbers = #tpu.dot_dimension_numbers<[2], [1], [1], [2], [0, 0, 0, 1, 1, 2], [0], [0]>} : vector<1x8x8xbf16>, vector<1x8x16xbf16>, vector<1x8x16xf32> -> vector<1x8x16xf32>
    "tpu.trace_stop"() : () -> ()
    %63 = vector.extract_strided_slice %39 {offsets = [0, 16], sizes = [8, 16], strides = [1, 1]} : vector<8x384xf32> to vector<8x16xf32>
    %64 = vector.extract_strided_slice %39 {offsets = [0, 144], sizes = [8, 16], strides = [1, 1]} : vector<8x384xf32> to vector<8x16xf32>
    %65 = vector.extract_strided_slice %39 {offsets = [0, 272], sizes = [8, 16], strides = [1, 1]} : vector<8x384xf32> to vector<8x16xf32>
    %66 = vector.shape_cast %63 : vector<8x16xf32> to vector<1x8x16xf32>
    %67 = arith.truncf %66 : vector<1x8x16xf32> to vector<1x8x16xbf16>
    %68 = vector.shape_cast %64 : vector<8x16xf32> to vector<1x8x16xf32>
    %69 = arith.truncf %68 : vector<1x8x16xf32> to vector<1x8x16xbf16>
    %70 = vector.shape_cast %65 : vector<8x16xf32> to vector<1x8x16xf32>
    %71 = arith.truncf %70 : vector<1x8x16xf32> to vector<1x8x16xbf16>
    "tpu.trace_start"() <{level = 10 : i32, message = "bqd,bkd->bqk"}> : () -> ()
    %cst_25 = arith.constant dense<0.000000e+00> : vector<1x8x8xf32>
    %72 = tpu.matmul %67, %69, %cst_25 {dimension_numbers = #tpu.dot_dimension_numbers<[2], [2], [1], [1], [0, 0, 0, 1, 1, 1], [0], [0]>} : vector<1x8x16xbf16>, vector<1x8x16xbf16>, vector<1x8x8xf32> -> vector<1x8x8xf32>
    "tpu.trace_stop"() : () -> ()
    %73 = arith.addf %72, %5 : vector<1x8x8xf32>
    %cst_26 = arith.constant dense<0xFF800000> : vector<1x8xf32>
    %74 = vector.multi_reduction <maximumf>, %73, %cst_26 [2] : vector<1x8x8xf32> to vector<1x8xf32>
    %75 = vector.shape_cast %74 : vector<1x8xf32> to vector<1x8x1xf32>
    %76 = vector.broadcast %75 : vector<1x8x1xf32> to vector<1x8x8xf32>
    %77 = arith.subf %73, %76 : vector<1x8x8xf32>
    %78 = math.exp %77 : vector<1x8x8xf32>
    %cst_27 = arith.constant dense<0.000000e+00> : vector<1x8xf32>
    %79 = vector.multi_reduction <add>, %78, %cst_27 [2] : vector<1x8x8xf32> to vector<1x8xf32>
    %80 = vector.shape_cast %79 : vector<1x8xf32> to vector<1x8x1xf32>
    %81 = tpu.reciprocal %80 : vector<1x8x1xf32> -> vector<1x8x1xf32>
    %82 = vector.broadcast %81 : vector<1x8x1xf32> to vector<1x8x8xf32>
    %83 = arith.mulf %78, %82 : vector<1x8x8xf32>
    %84 = arith.truncf %83 : vector<1x8x8xf32> to vector<1x8x8xbf16>
    "tpu.trace_start"() <{level = 10 : i32, message = "bqk,bkd->bqd"}> : () -> ()
    %cst_28 = arith.constant dense<0.000000e+00> : vector<1x8x16xf32>
    %85 = tpu.matmul %84, %71, %cst_28 {dimension_numbers = #tpu.dot_dimension_numbers<[2], [1], [1], [2], [0, 0, 0, 1, 1, 2], [0], [0]>} : vector<1x8x8xbf16>, vector<1x8x16xbf16>, vector<1x8x16xf32> -> vector<1x8x16xf32>
    "tpu.trace_stop"() : () -> ()
    %86 = tpu.concatenate %62, %85 in 2 : vector<1x8x16xf32>, vector<1x8x16xf32> -> vector<1x8x32xf32>
    %87 = vector.shape_cast %86 : vector<1x8x32xf32> to vector<8x32xf32>
    %88 = arith.truncf %87 : vector<8x32xf32> to vector<8x32xbf16>
    %c0_29 = arith.constant 0 : index
    %c0_30 = arith.constant 0 : index
    %c0_31 = arith.constant 0 : index
    %89 = vector.load %arg8[%c0_29, %c0_30, %c0_31] : memref<1x32x128xbf16, #tpu.memory_space<vmem>>, vector<1x32x128xbf16>
    %90 = vector.shape_cast %89 : vector<1x32x128xbf16> to vector<32x128xbf16>
    %cst_32 = arith.constant dense<0.000000e+00> : vector<8x128xf32>
    %91 = tpu.matmul %88, %90, %cst_32 {dimension_numbers = #tpu.dot_dimension_numbers<[1], [0], [0], [1], [0, 0, 1, 1], [], []>} : vector<8x32xbf16>, vector<32x128xbf16>, vector<8x128xf32> -> vector<8x128xf32>
    %c0_33 = arith.constant 0 : index
    %c0_34 = arith.constant 0 : index
    %c0_35 = arith.constant 0 : index
    %92 = vector.load %arg9[%c0_33, %c0_34, %c0_35] : memref<1x1x128xf32, #tpu.memory_space<vmem>>, vector<1x1x128xf32>
    %93 = vector.shape_cast %92 : vector<1x1x128xf32> to vector<1x128xf32>
    %94 = vector.broadcast %93 : vector<1x128xf32> to vector<8x128xf32>
    %95 = arith.addf %91, %94 : vector<8x128xf32>
    %96 = arith.addf %3, %95 : vector<8x128xf32>
    %c0_36 = arith.constant 0 : index
    %c0_37 = arith.constant 0 : index
    %c0_38 = arith.constant 0 : index
    %97 = vector.load %arg10[%c0_36, %c0_37, %c0_38] : memref<1x1x128xf32, #tpu.memory_space<vmem>>, vector<1x1x128xf32>
    %98 = vector.shape_cast %97 : vector<1x1x128xf32> to vector<1x128xf32>
    %c0_39 = arith.constant 0 : index
    %c0_40 = arith.constant 0 : index
    %c0_41 = arith.constant 0 : index
    %99 = vector.load %arg11[%c0_39, %c0_40, %c0_41] : memref<1x1x128xf32, #tpu.memory_space<vmem>>, vector<1x1x128xf32>
    %100 = vector.shape_cast %99 : vector<1x1x128xf32> to vector<1x128xf32>
    %cst_42 = arith.constant dense<0.000000e+00> : vector<8xf32>
    %101 = vector.multi_reduction <add>, %96, %cst_42 [1] : vector<8x128xf32> to vector<8xf32>
    %102 = vector.shape_cast %101 : vector<8xf32> to vector<8x1xf32>
    %103 = arith.mulf %96, %96 : vector<8x128xf32>
    %cst_43 = arith.constant dense<0.000000e+00> : vector<8xf32>
    %104 = vector.multi_reduction <add>, %103, %cst_43 [1] : vector<8x128xf32> to vector<8xf32>
    %105 = vector.shape_cast %104 : vector<8xf32> to vector<8x1xf32>
    %cst_44 = arith.constant 3.125000e-02 : f32
    %106 = vector.broadcast %cst_44 : f32 to vector<8x1xf32>
    %107 = arith.mulf %102, %106 : vector<8x1xf32>
    %cst_45 = arith.constant 3.125000e-02 : f32
    %108 = vector.broadcast %cst_45 : f32 to vector<8x1xf32>
    %109 = arith.mulf %105, %108 : vector<8x1xf32>
    %110 = arith.mulf %107, %107 : vector<8x1xf32>
    %111 = arith.subf %109, %110 : vector<8x1xf32>
    %cst_46 = arith.constant 9.99999974E-6 : f32
    %112 = vector.broadcast %cst_46 : f32 to vector<8x1xf32>
    %113 = arith.addf %111, %112 : vector<8x1xf32>
    %114 = math.rsqrt %113 : vector<8x1xf32>
    %115 = vector.broadcast %107 : vector<8x1xf32> to vector<8x128xf32>
    %116 = arith.subf %96, %115 : vector<8x128xf32>
    %117 = vector.broadcast %114 : vector<8x1xf32> to vector<8x128xf32>
    %118 = arith.mulf %116, %117 : vector<8x128xf32>
    %119 = vector.broadcast %98 : vector<1x128xf32> to vector<8x128xf32>
    %120 = arith.mulf %118, %119 : vector<8x128xf32>
    %121 = vector.broadcast %100 : vector<1x128xf32> to vector<8x128xf32>
    %122 = arith.addf %120, %121 : vector<8x128xf32>
    %123 = arith.truncf %122 : vector<8x128xf32> to vector<8x128xbf16>
    %c0_47 = arith.constant 0 : index
    %c0_48 = arith.constant 0 : index
    %c0_49 = arith.constant 0 : index
    %124 = vector.load %arg12[%c0_47, %c0_48, %c0_49] : memref<1x128x128xbf16, #tpu.memory_space<vmem>>, vector<1x128x128xbf16>
    %125 = vector.shape_cast %124 : vector<1x128x128xbf16> to vector<128x128xbf16>
    %cst_50 = arith.constant dense<0.000000e+00> : vector<8x128xf32>
    %126 = tpu.matmul %123, %125, %cst_50 {dimension_numbers = #tpu.dot_dimension_numbers<[1], [0], [0], [1], [0, 0, 1, 1], [], []>} : vector<8x128xbf16>, vector<128x128xbf16>, vector<8x128xf32> -> vector<8x128xf32>
    %c0_51 = arith.constant 0 : index
    %c0_52 = arith.constant 0 : index
    %c0_53 = arith.constant 0 : index
    %127 = vector.load %arg13[%c0_51, %c0_52, %c0_53] : memref<1x1x128xf32, #tpu.memory_space<vmem>>, vector<1x1x128xf32>
    %128 = vector.shape_cast %127 : vector<1x1x128xf32> to vector<1x128xf32>
    %129 = vector.broadcast %128 : vector<1x128xf32> to vector<8x128xf32>
    %130 = arith.addf %126, %129 : vector<8x128xf32>
    %cst_54 = arith.constant 0.000000e+00 : f32
    %131 = vector.broadcast %cst_54 : f32 to vector<8x128xf32>
    %132 = arith.maximumf %130, %131 : vector<8x128xf32>
    %133 = arith.truncf %132 : vector<8x128xf32> to vector<8x128xbf16>
    %c0_55 = arith.constant 0 : index
    %c0_56 = arith.constant 0 : index
    %c0_57 = arith.constant 0 : index
    %134 = vector.load %arg14[%c0_55, %c0_56, %c0_57] : memref<1x128x128xbf16, #tpu.memory_space<vmem>>, vector<1x128x128xbf16>
    %135 = vector.shape_cast %134 : vector<1x128x128xbf16> to vector<128x128xbf16>
    %cst_58 = arith.constant dense<0.000000e+00> : vector<8x128xf32>
    %136 = tpu.matmul %133, %135, %cst_58 {dimension_numbers = #tpu.dot_dimension_numbers<[1], [0], [0], [1], [0, 0, 1, 1], [], []>} : vector<8x128xbf16>, vector<128x128xbf16>, vector<8x128xf32> -> vector<8x128xf32>
    %c0_59 = arith.constant 0 : index
    %c0_60 = arith.constant 0 : index
    %c0_61 = arith.constant 0 : index
    %137 = vector.load %arg15[%c0_59, %c0_60, %c0_61] : memref<1x1x128xf32, #tpu.memory_space<vmem>>, vector<1x1x128xf32>
    %138 = vector.shape_cast %137 : vector<1x1x128xf32> to vector<1x128xf32>
    %139 = vector.broadcast %138 : vector<1x128xf32> to vector<8x128xf32>
    %140 = arith.addf %136, %139 : vector<8x128xf32>
    %141 = arith.addf %96, %140 : vector<8x128xf32>
    %c0_62 = arith.constant 0 : index
    %c0_63 = arith.constant 0 : index
    %142 = vector.load %arg19[%c0_62, %c0_63] : memref<8x128xf32, #tpu.memory_space<vmem>>, vector<8x128xf32>
    tpu.vector_store %arg19[%c0_62, %c0_63], %141 {strides = array<i32>} : memref<8x128xf32, #tpu.memory_space<vmem>>, vector<8x128xf32>,
    %c1_i32 = arith.constant 1 : i32
    %143 = arith.cmpi eq, %arg1, %c1_i32 : i32
    %144 = arith.extui %143 : i1 to i32
    %c0_i32_64 = arith.constant 0 : i32
    %145 = arith.cmpi ne, %144, %c0_i32_64 : i32
    scf.if %145 {
      %c0_65 = arith.constant 0 : index
      %c0_66 = arith.constant 0 : index
      %146 = vector.load %arg16[%c0_65, %c0_66] : memref<1x128xf32, #tpu.memory_space<vmem>>, vector<1x128xf32>
      %c0_67 = arith.constant 0 : index
      %c0_68 = arith.constant 0 : index
      %147 = vector.load %arg17[%c0_67, %c0_68] : memref<1x128xf32, #tpu.memory_space<vmem>>, vector<1x128xf32>
      %cst_69 = arith.constant dense<0.000000e+00> : vector<8xf32>
      %148 = vector.multi_reduction <add>, %141, %cst_69 [1] : vector<8x128xf32> to vector<8xf32>
      %149 = vector.shape_cast %148 : vector<8xf32> to vector<8x1xf32>
      %150 = arith.mulf %141, %141 : vector<8x128xf32>
      %cst_70 = arith.constant dense<0.000000e+00> : vector<8xf32>
      %151 = vector.multi_reduction <add>, %150, %cst_70 [1] : vector<8x128xf32> to vector<8xf32>
      %152 = vector.shape_cast %151 : vector<8xf32> to vector<8x1xf32>
      %cst_71 = arith.constant 3.125000e-02 : f32
      %153 = vector.broadcast %cst_71 : f32 to vector<8x1xf32>
      %154 = arith.mulf %149, %153 : vector<8x1xf32>
      %cst_72 = arith.constant 3.125000e-02 : f32
      %155 = vector.broadcast %cst_72 : f32 to vector<8x1xf32>
      %156 = arith.mulf %152, %155 : vector<8x1xf32>
      %157 = arith.mulf %154, %154 : vector<8x1xf32>
      %158 = arith.subf %156, %157 : vector<8x1xf32>
      %cst_73 = arith.constant 9.99999974E-6 : f32
      %159 = vector.broadcast %cst_73 : f32 to vector<8x1xf32>
      %160 = arith.addf %158, %159 : vector<8x1xf32>
      %161 = math.rsqrt %160 : vector<8x1xf32>
      %162 = vector.broadcast %154 : vector<8x1xf32> to vector<8x128xf32>
      %163 = arith.subf %141, %162 : vector<8x128xf32>
      %164 = vector.broadcast %161 : vector<8x1xf32> to vector<8x128xf32>
      %165 = arith.mulf %163, %164 : vector<8x128xf32>
      %166 = vector.broadcast %146 : vector<1x128xf32> to vector<8x128xf32>
      %167 = arith.mulf %165, %166 : vector<8x128xf32>
      %168 = vector.broadcast %147 : vector<1x128xf32> to vector<8x128xf32>
      %169 = arith.addf %167, %168 : vector<8x128xf32>
      %c0_74 = arith.constant 0 : index
      %c0_75 = arith.constant 0 : index
      %170 = vector.load %arg18[%c0_74, %c0_75] : memref<8x128xf32, #tpu.memory_space<vmem>>, vector<8x128xf32>
      tpu.vector_store %arg18[%c0_74, %c0_75], %169 {strides = array<i32>} : memref<8x128xf32, #tpu.memory_space<vmem>>, vector<8x128xf32>,
    } else {
    }
    return
  }
  func.func @transform_0(%arg0: i32, %arg1: i32) -> (i32, i32) {
    %c0_i32 = arith.constant 0 : i32
    %c0_i32_0 = arith.constant 0 : i32
    return %arg0, %c0_i32 : i32, i32
  }
  func.func @transform_1(%arg0: i32, %arg1: i32) -> (i32, i32) {
    %c0_i32 = arith.constant 0 : i32
    %c0_i32_0 = arith.constant 0 : i32
    %c0_i32_1 = arith.constant 0 : i32
    return %c0_i32, %c0_i32_0 : i32, i32
  }
  func.func @transform_2(%arg0: i32, %arg1: i32) -> (i32, i32, i32) {
    %c0_i32 = arith.constant 0 : i32
    %c0_i32_0 = arith.constant 0 : i32
    %c0_i32_1 = arith.constant 0 : i32
    return %arg1, %c0_i32, %c0_i32_0 : i32, i32, i32
  }
  func.func @transform_3(%arg0: i32, %arg1: i32) -> (i32, i32, i32) {
    %c0_i32 = arith.constant 0 : i32
    %c0_i32_0 = arith.constant 0 : i32
    %c0_i32_1 = arith.constant 0 : i32
    return %arg1, %c0_i32, %c0_i32_0 : i32, i32, i32
  }
  func.func @transform_4(%arg0: i32, %arg1: i32) -> (i32, i32, i32) {
    %c0_i32 = arith.constant 0 : i32
    %c0_i32_0 = arith.constant 0 : i32
    %c0_i32_1 = arith.constant 0 : i32
    return %arg1, %c0_i32, %c0_i32_0 : i32, i32, i32
  }
  func.func @transform_5(%arg0: i32, %arg1: i32) -> (i32, i32, i32) {
    %c0_i32 = arith.constant 0 : i32
    %c0_i32_0 = arith.constant 0 : i32
    %c0_i32_1 = arith.constant 0 : i32
    return %arg1, %c0_i32, %c0_i32_0 : i32, i32, i32
  }
  func.func @transform_6(%arg0: i32, %arg1: i32) -> (i32, i32, i32) {
    %c0_i32 = arith.constant 0 : i32
    %c0_i32_0 = arith.constant 0 : i32
    %c0_i32_1 = arith.constant 0 : i32
    return %arg1, %c0_i32, %c0_i32_0 : i32, i32, i32
  }
  func.func @transform_7(%arg0: i32, %arg1: i32) -> (i32, i32, i32) {
    %c0_i32 = arith.constant 0 : i32
    %c0_i32_0 = arith.constant 0 : i32
    %c0_i32_1 = arith.constant 0 : i32
    return %arg1, %c0_i32, %c0_i32_0 : i32, i32, i32
  }
  func.func @transform_8(%arg0: i32, %arg1: i32) -> (i32, i32, i32) {
    %c0_i32 = arith.constant 0 : i32
    %c0_i32_0 = arith.constant 0 : i32
    %c0_i32_1 = arith.constant 0 : i32
    return %arg1, %c0_i32, %c0_i32_0 : i32, i32, i32
  }
  func.func @transform_9(%arg0: i32, %arg1: i32) -> (i32, i32, i32) {
    %c0_i32 = arith.constant 0 : i32
    %c0_i32_0 = arith.constant 0 : i32
    %c0_i32_1 = arith.constant 0 : i32
    return %arg1, %c0_i32, %c0_i32_0 : i32, i32, i32
  }
  func.func @transform_10(%arg0: i32, %arg1: i32) -> (i32, i32, i32) {
    %c0_i32 = arith.constant 0 : i32
    %c0_i32_0 = arith.constant 0 : i32
    %c0_i32_1 = arith.constant 0 : i32
    return %arg1, %c0_i32, %c0_i32_0 : i32, i32, i32
  }
  func.func @transform_11(%arg0: i32, %arg1: i32) -> (i32, i32, i32) {
    %c0_i32 = arith.constant 0 : i32
    %c0_i32_0 = arith.constant 0 : i32
    %c0_i32_1 = arith.constant 0 : i32
    return %arg1, %c0_i32, %c0_i32_0 : i32, i32, i32
  }
  func.func @transform_12(%arg0: i32, %arg1: i32) -> (i32, i32, i32) {
    %c0_i32 = arith.constant 0 : i32
    %c0_i32_0 = arith.constant 0 : i32
    %c0_i32_1 = arith.constant 0 : i32
    return %arg1, %c0_i32, %c0_i32_0 : i32, i32, i32
  }
  func.func @transform_13(%arg0: i32, %arg1: i32) -> (i32, i32, i32) {
    %c0_i32 = arith.constant 0 : i32
    %c0_i32_0 = arith.constant 0 : i32
    %c0_i32_1 = arith.constant 0 : i32
    return %arg1, %c0_i32, %c0_i32_0 : i32, i32, i32
  }
  func.func @transform_14(%arg0: i32, %arg1: i32) -> (i32, i32) {
    %c0_i32 = arith.constant 0 : i32
    %c0_i32_0 = arith.constant 0 : i32
    %c0_i32_1 = arith.constant 0 : i32
    return %c0_i32, %c0_i32_0 : i32, i32
  }
  func.func @transform_15(%arg0: i32, %arg1: i32) -> (i32, i32) {
    %c0_i32 = arith.constant 0 : i32
    %c0_i32_0 = arith.constant 0 : i32
    %c0_i32_1 = arith.constant 0 : i32
    return %c0_i32, %c0_i32_0 : i32, i32
  }
  func.func @transform_16(%arg0: i32, %arg1: i32) -> (i32, i32) {
    %c0_i32 = arith.constant 0 : i32
    %c0_i32_0 = arith.constant 0 : i32
    return %arg0, %c0_i32 : i32, i32
  }
}

</mosaic_0001>

<llo_original>
// kernel: tpu_custom_call.1
$region0: #{tpu_custom_call.1}
  #allocation0 [shape = 'u32[]', space=smem, size = 0x4, offset = 0x4, fixed_abs, tag = 'smem constant byte address 0x4 - core index']
  #allocation1 [shape = 'u32[72,128]{1,0:T(1,128)}', space=vmem, size = 0x9000, scoped, tag = 'internal scratch']
  #allocation2 [shape = 'f32[8,128]{1,0:T(8,128)}', space=vmem, size = 0x1000, scoped, tag = 'scratch operand']
  %s0 = inlined_call_operand.hbm [shape: f32[16,128], index: 0, kind: input, shape index: {}]
  %s1 = inlined_call_operand.hbm [shape: f32[8,8], index: 1, kind: input, shape index: {}]
  %s2 = inlined_call_operand.hbm [shape: f32[2,1,128], index: 2, kind: input, shape index: {}]
  %s3 = inlined_call_operand.vmem [shape: f32[2,1,128], index: 3, kind: input, shape index: {}]
  %s4 = inlined_call_operand.hbm [shape: bf16[2,128,384], index: 4, kind: input, shape index: {}]
  %s5 = inlined_call_operand.hbm [shape: f32[2,1,384], index: 5, kind: input, shape index: {}]
  %s6 = inlined_call_operand.hbm [shape: bf16[2,32,128], index: 6, kind: input, shape index: {}]
  %s7 = inlined_call_operand.vmem [shape: f32[2,1,128], index: 7, kind: input, shape index: {}]
  %s8 = inlined_call_operand.vmem [shape: f32[2,1,128], index: 8, kind: input, shape index: {}]
  %s9 = inlined_call_operand.vmem [shape: f32[2,1,128], index: 9, kind: input, shape index: {}]
  %s10 = inlined_call_operand.hbm [shape: bf16[2,128,128], index: 10, kind: input, shape index: {}]
  %s11 = inlined_call_operand.vmem [shape: f32[2,1,128], index: 11, kind: input, shape index: {}]
  %s12 = inlined_call_operand.hbm [shape: bf16[2,128,128], index: 12, kind: input, shape index: {}]
  %s13 = inlined_call_operand.vmem [shape: f32[2,1,128], index: 13, kind: input, shape index: {}]
  %s14 = inlined_call_operand.vmem [shape: f32[1,128], index: 14, kind: input, shape index: {}]
  %s15 = inlined_call_operand.vmem [shape: f32[1,128], index: 15, kind: input, shape index: {}]
  %s16 = inlined_call_operand.hbm [shape: f32[16,128], index: 16, kind: output, shape index: {}]
  %s17 = sld [smem:[#allocation0]]
  $region137: #{tpu_custom_call.1} parent=0
    _
  %s19 = ssub.s32 1, %s17
  %s20 = scalar_select 0, %s19, %s17
  $region1: #{tpu_custom_call.1} parent=0
    #allocation3 [shape = 'u8[8192]{0}', space=vmem, size = 0x2000, scoped, tag = 'input window, operand 0']
    #allocation4 [shape = 's32[2]{0}', space=sflag, size = 0x8, scoped, tag = 'scoped memory for tpu_custom_call.1']
    #allocation5 [shape = 's32[2]{0}', space=sflag, size = 0x8, scoped, tag = 'scoped memory for tpu_custom_call.1']
    #allocation6 [shape = 'u8[4096]{0}', space=vmem, size = 0x1000, scoped, tag = 'input window, operand 1, single buffered']
    #allocation7 [shape = 's32[1]{0}', space=sflag, size = 0x4, scoped, tag = 'scoped memory for tpu_custom_call.1']
    #allocation8 [shape = 'u8[1024]{0}', space=vmem, size = 0x400, scoped, tag = 'input window, operand 2']
    #allocation9 [shape = 'u8[196608]{0}', space=vmem, size = 0x30000, scoped, tag = 'input window, operand 4']
    #allocation10 [shape = 'u8[3072]{0}', space=vmem, size = 0xc00, scoped, tag = 'input window, operand 5']
    #allocation11 [shape = 'u8[16384]{0}', space=vmem, size = 0x4000, scoped, tag = 'input window, operand 6']
    #allocation12 [shape = 'u8[65536]{0}', space=vmem, size = 0x10000, scoped, tag = 'input window, operand 10']
    #allocation13 [shape = 'u8[65536]{0}', space=vmem, size = 0x10000, scoped, tag = 'input window, operand 12']
    #allocation14 [shape = 'u8[8192]{0}', space=vmem, size = 0x2000, scoped, tag = 'output window, operand 0']
    %21 = vsyncpa [#allocation4], 0
    %s22 = scalar_lea.sflag [#allocation4], 1
    %23 = vsyncpa %s22, 0
    %24 = vsyncpa [#allocation7], 0
    %25 = vsyncpa [#allocation5], 0
    %s26 = scalar_lea.sflag [#allocation5], 1
    %27 = vsyncpa %s26, 0
    loop: start=0, step=1, limit=6
    $region2: #{tpu_custom_call.1} parent=1 // loop_pre_header
      _
    $region3: #{tpu_custom_call.1} parent=1 // loop_header
      %s29 = sphi 0, %s33
      %p30 = scmp.ge.s32.totalorder %s29, 6
      %s36 = sphi 0, %s48
      %s37 = sphi 0, %s44
      %s38 = sphi 0, %s36
      %s39 = sphi 0, %s37
      %s40 = sphi 0, %s38
      %s41 = sphi 0, %s39
      %s51 = sphi 0, %s53
      %s54 = sphi 0, %s51
      %s55 = sphi 0, %s54
      %s71 = sphi 0, %s55
      %s75 = sphi 0, %s75
      %s77 = sphi 0, %s75
      %s78 = sphi 0, %s77
      %s92 = sphi 0, %s78
      %s98 = sphi 0, %s100
      %s101 = sphi 0, %s98
      %s102 = sphi 0, %s101
      %s118 = sphi 0, %s102
      %s124 = sphi 0, %s126
      %s127 = sphi 0, %s124
      %s128 = sphi 0, %s127
      %s144 = sphi 0, %s128
      %s150 = sphi 0, %s152
      %s153 = sphi 0, %s150
      %s154 = sphi 0, %s153
      %s170 = sphi 0, %s154
      %s176 = sphi 0, %s178
      %s179 = sphi 0, %s176
      %s180 = sphi 0, %s179
      %s196 = sphi 0, %s180
      %s202 = sphi 0, %s204
      %s205 = sphi 0, %s202
      %s206 = sphi 0, %s205
      %s222 = sphi 0, %s206
      %s228 = sphi 0, %s230
      %s231 = sphi 0, %s228
      %s232 = sphi 0, %s231
      %s248 = sphi 0, %s232
      %s254 = sphi 0, %s256
      %s257 = sphi 0, %s254
      %s258 = sphi 0, %s257
      %s274 = sphi 0, %s258
      %s280 = sphi 0, %s282
      %s283 = sphi 0, %s280
      %s284 = sphi 0, %s283
      %s300 = sphi 0, %s284
      %s306 = sphi 0, %s308
      %s309 = sphi 0, %s306
      %s310 = sphi 0, %s309
      %s326 = sphi 0, %s310
      %s332 = sphi 0, %s334
      %s335 = sphi 0, %s332
      %s336 = sphi 0, %s335
      %s352 = sphi 0, %s336
      %s358 = sphi 0, %s360
      %s361 = sphi 0, %s358
      %s362 = sphi 0, %s361
      %s378 = sphi 0, %s362
      %s384 = sphi 0, %s386
      %s387 = sphi 0, %s384
      %s388 = sphi 0, %s387
      %s404 = sphi 0, %s388
      %s408 = sphi 0, %s408
      %s410 = sphi 0, %s408
      %s411 = sphi 0, %s410
      %s425 = sphi 0, %s411
      %s429 = sphi 0, %s429
      %s431 = sphi 0, %s429
      %s432 = sphi 0, %s431
      %s446 = sphi 0, %s432
      %s452 = sphi 0, %s454
      %s455 = sphi 0, %s452
      %s456 = sphi 0, %s455
      %s472 = sphi 0, %s456
    $region4: #{tpu_custom_call.1} parent=1 // loop_header_branch
      %32 = sbr.rel (%p30) target = $region8
    $region5: #{tpu_custom_call.1} parent=1 // loop_body
      %s34 = ssub.s32 %s29, 1
      %s35 = ssub.s32 %s29, 2
      %s42 = sadd.s32 1, %s37
      %p43 = scmp.ge.s32.totalorder %s42, 2
      %s44 = scalar_select %p43, 0, %s42
      %s45 = sadd.s32 1, %s36
      %s46 = scalar_select %p43, %s45, %s36
      %p47 = scmp.ge.s32.totalorder %s46, 2
      %s48 = scalar_select %p47, 0, %s46
      %s49 = ssub.s32 %s36, %s48
      %p50 = scmp.eq.s32.totalorder %s49, 0
      %s52 = sadd.s32 %s51, 1
      %s53 = scalar_select %p50, %s51, %s52
      %p56 = pneg %p50
      %p57 = scmp.eq.s32.totalorder %s29, 3
      %p58 = por %p56, %p57
      %p59 = scmp.ne.s32.totalorder %s51, %s54
      %p60 = scmp.eq.s32.totalorder %s29, 0
      %p61 = por %p59, %p60
      %p62 = scmp.ne.s32.totalorder %s51, %s54
      %p63 = scmp.eq.s32.totalorder %s34, 3
      %p64 = por %p62, %p63
      %p65 = scmp.ne.s32.totalorder %s54, %s55
      %p66 = scmp.eq.s32.totalorder %s34, 0
      %p67 = por %p65, %p66
      %p68 = scmp.ne.s32.totalorder %s54, %s55
      %p69 = scmp.eq.s32.totalorder %s35, 3
      %p70 = por %p68, %p69
      %p72 = scmp.ne.s32.totalorder %s55, %s71
      %p73 = scmp.eq.s32.totalorder %s35, 0
      %p74 = por %p72, %p73
      %s76 = sadd.s32 %s75, 1
      %p79 = scmp.eq.s32.totalorder %s29, 3
      %p80 = scmp.ne.s32.totalorder %s75, %s77
      %p81 = scmp.eq.s32.totalorder %s29, 0
      %p82 = por %p80, %p81
      %p83 = scmp.ne.s32.totalorder %s75, %s77
      %p84 = scmp.eq.s32.totalorder %s34, 3
      %p85 = por %p83, %p84
      %p86 = scmp.ne.s32.totalorder %s77, %s78
      %p87 = scmp.eq.s32.totalorder %s34, 0
      %p88 = por %p86, %p87
      %p89 = scmp.ne.s32.totalorder %s77, %s78
      %p90 = scmp.eq.s32.totalorder %s35, 3
      %p91 = por %p89, %p90
      %p93 = scmp.ne.s32.totalorder %s78, %s92
      %p94 = scmp.eq.s32.totalorder %s35, 0
      %p95 = por %p93, %p94
      %s96 = ssub.s32 %s37, %s44
      %p97 = scmp.eq.s32.totalorder %s96, 0
      %s99 = sadd.s32 %s98, 1
      %s100 = scalar_select %p97, %s98, %s99
      %p103 = pneg %p97
      %p104 = scmp.eq.s32.totalorder %s29, 3
      %p105 = por %p103, %p104
      %p106 = scmp.ne.s32.totalorder %s98, %s101
      %p107 = scmp.eq.s32.totalorder %s29, 0
      %p108 = por %p106, %p107
      %p109 = scmp.ne.s32.totalorder %s98, %s101
      %p110 = scmp.eq.s32.totalorder %s34, 3
      %p111 = por %p109, %p110
      %p112 = scmp.ne.s32.totalorder %s101, %s102
      %p113 = scmp.eq.s32.totalorder %s34, 0
      %p114 = por %p112, %p113
      %p115 = scmp.ne.s32.totalorder %s101, %s102
      %p116 = scmp.eq.s32.totalorder %s35, 3
      %p117 = por %p115, %p116
      %p119 = scmp.ne.s32.totalorder %s102, %s118
      %p120 = scmp.eq.s32.totalorder %s35, 0
      %p121 = por %p119, %p120
      %s122 = ssub.s32 %s37, %s44
      %p123 = scmp.eq.s32.totalorder %s122, 0
      %s125 = sadd.s32 %s124, 1
      %s126 = scalar_select %p123, %s124, %s125
      %p129 = pneg %p123
      %p130 = scmp.eq.s32.totalorder %s29, 3
      %p131 = por %p129, %p130
      %p132 = scmp.ne.s32.totalorder %s124, %s127
      %p133 = scmp.eq.s32.totalorder %s29, 0
      %p134 = por %p132, %p133
      %p135 = scmp.ne.s32.totalorder %s124, %s127
      %p136 = scmp.eq.s32.totalorder %s34, 3
      %p137 = por %p135, %p136
      %p138 = scmp.ne.s32.totalorder %s127, %s128
      %p139 = scmp.eq.s32.totalorder %s34, 0
      %p140 = por %p138, %p139
      %p141 = scmp.ne.s32.totalorder %s127, %s128
      %p142 = scmp.eq.s32.totalorder %s35, 3
      %p143 = por %p141, %p142
      %p145 = scmp.ne.s32.totalorder %s128, %s144
      %p146 = scmp.eq.s32.totalorder %s35, 0
      %p147 = por %p145, %p146
      %s148 = ssub.s32 %s37, %s44
      %p149 = scmp.eq.s32.totalorder %s148, 0
      %s151 = sadd.s32 %s150, 1
      %s152 = scalar_select %p149, %s150, %s151
      %p155 = pneg %p149
      %p156 = scmp.eq.s32.totalorder %s29, 3
      %p157 = por %p155, %p156
      %p158 = scmp.ne.s32.totalorder %s150, %s153
      %p159 = scmp.eq.s32.totalorder %s29, 0
      %p160 = por %p158, %p159
      %p161 = scmp.ne.s32.totalorder %s150, %s153
      %p162 = scmp.eq.s32.totalorder %s34, 3
      %p163 = por %p161, %p162
      %p164 = scmp.ne.s32.totalorder %s153, %s154
      %p165 = scmp.eq.s32.totalorder %s34, 0
      %p166 = por %p164, %p165
      %p167 = scmp.ne.s32.totalorder %s153, %s154
      %p168 = scmp.eq.s32.totalorder %s35, 3
      %p169 = por %p167, %p168
      %p171 = scmp.ne.s32.totalorder %s154, %s170
      %p172 = scmp.eq.s32.totalorder %s35, 0
      %p173 = por %p171, %p172
      %s174 = ssub.s32 %s37, %s44
      %p175 = scmp.eq.s32.totalorder %s174, 0
      %s177 = sadd.s32 %s176, 1
      %s178 = scalar_select %p175, %s176, %s177
      %p181 = pneg %p175
      %p182 = scmp.eq.s32.totalorder %s29, 3
      %p183 = por %p181, %p182
      %p184 = scmp.ne.s32.totalorder %s176, %s179
      %p185 = scmp.eq.s32.totalorder %s29, 0
      %p186 = por %p184, %p185
      %p187 = scmp.ne.s32.totalorder %s176, %s179
      %p188 = scmp.eq.s32.totalorder %s34, 3
      %p189 = por %p187, %p188
      %p190 = scmp.ne.s32.totalorder %s179, %s180
      %p191 = scmp.eq.s32.totalorder %s34, 0
      %p192 = por %p190, %p191
      %p193 = scmp.ne.s32.totalorder %s179, %s180
      %p194 = scmp.eq.s32.totalorder %s35, 3
      %p195 = por %p193, %p194
      %p197 = scmp.ne.s32.totalorder %s180, %s196
      %p198 = scmp.eq.s32.totalorder %s35, 0
      %p199 = por %p197, %p198
      %s200 = ssub.s32 %s37, %s44
      %p201 = scmp.eq.s32.totalorder %s200, 0
      %s203 = sadd.s32 %s202, 1
      %s204 = scalar_select %p201, %s202, %s203
      %p207 = pneg %p201
      %p208 = scmp.eq.s32.totalorder %s29, 3
      %p209 = por %p207, %p208
      %p210 = scmp.ne.s32.totalorder %s202, %s205
      %p211 = scmp.eq.s32.totalorder %s29, 0
      %p212 = por %p210, %p211
      %p213 = scmp.ne.s32.totalorder %s202, %s205
      %p214 = scmp.eq.s32.totalorder %s34, 3
      %p215 = por %p213, %p214
      %p216 = scmp.ne.s32.totalorder %s205, %s206
      %p217 = scmp.eq.s32.totalorder %s34, 0
      %p218 = por %p216, %p217
      %p219 = scmp.ne.s32.totalorder %s205, %s206
      %p220 = scmp.eq.s32.totalorder %s35, 3
      %p221 = por %p219, %p220
      %p223 = scmp.ne.s32.totalorder %s206, %s222
      %p224 = scmp.eq.s32.totalorder %s35, 0
      %p225 = por %p223, %p224
      %s226 = ssub.s32 %s37, %s44
      %p227 = scmp.eq.s32.totalorder %s226, 0
      %s229 = sadd.s32 %s228, 1
      %s230 = scalar_select %p227, %s228, %s229
      %p233 = pneg %p227
      %p234 = scmp.eq.s32.totalorder %s29, 3
      %p235 = por %p233, %p234
      %p236 = scmp.ne.s32.totalorder %s228, %s231
      %p237 = scmp.eq.s32.totalorder %s29, 0
      %p238 = por %p236, %p237
      %p239 = scmp.ne.s32.totalorder %s228, %s231
      %p240 = scmp.eq.s32.totalorder %s34, 3
      %p241 = por %p239, %p240
      %p242 = scmp.ne.s32.totalorder %s231, %s232
      %p243 = scmp.eq.s32.totalorder %s34, 0
      %p244 = por %p242, %p243
      %p245 = scmp.ne.s32.totalorder %s231, %s232
      %p246 = scmp.eq.s32.totalorder %s35, 3
      %p247 = por %p245, %p246
      %p249 = scmp.ne.s32.totalorder %s232, %s248
      %p250 = scmp.eq.s32.totalorder %s35, 0
      %p251 = por %p249, %p250
      %s252 = ssub.s32 %s37, %s44
      %p253 = scmp.eq.s32.totalorder %s252, 0
      %s255 = sadd.s32 %s254, 1
      %s256 = scalar_select %p253, %s254, %s255
      %p259 = pneg %p253
      %p260 = scmp.eq.s32.totalorder %s29, 3
      %p261 = por %p259, %p260
      %p262 = scmp.ne.s32.totalorder %s254, %s257
      %p263 = scmp.eq.s32.totalorder %s29, 0
      %p264 = por %p262, %p263
      %p265 = scmp.ne.s32.totalorder %s254, %s257
      %p266 = scmp.eq.s32.totalorder %s34, 3
      %p267 = por %p265, %p266
      %p268 = scmp.ne.s32.totalorder %s257, %s258
      %p269 = scmp.eq.s32.totalorder %s34, 0
      %p270 = por %p268, %p269
      %p271 = scmp.ne.s32.totalorder %s257, %s258
      %p272 = scmp.eq.s32.totalorder %s35, 3
      %p273 = por %p271, %p272
      %p275 = scmp.ne.s32.totalorder %s258, %s274
      %p276 = scmp.eq.s32.totalorder %s35, 0
      %p277 = por %p275, %p276
      %s278 = ssub.s32 %s37, %s44
      %p279 = scmp.eq.s32.totalorder %s278, 0
      %s281 = sadd.s32 %s280, 1
      %s282 = scalar_select %p279, %s280, %s281
      %p285 = pneg %p279
      %p286 = scmp.eq.s32.totalorder %s29, 3
      %p287 = por %p285, %p286
      %p288 = scmp.ne.s32.totalorder %s280, %s283
      %p289 = scmp.eq.s32.totalorder %s29, 0
      %p290 = por %p288, %p289
      %p291 = scmp.ne.s32.totalorder %s280, %s283
      %p292 = scmp.eq.s32.totalorder %s34, 3
      %p293 = por %p291, %p292
      %p294 = scmp.ne.s32.totalorder %s283, %s284
      %p295 = scmp.eq.s32.totalorder %s34, 0
      %p296 = por %p294, %p295
      %p297 = scmp.ne.s32.totalorder %s283, %s284
      %p298 = scmp.eq.s32.totalorder %s35, 3
      %p299 = por %p297, %p298
      %p301 = scmp.ne.s32.totalorder %s284, %s300
      %p302 = scmp.eq.s32.totalorder %s35, 0
      %p303 = por %p301, %p302
      %s304 = ssub.s32 %s37, %s44
      %p305 = scmp.eq.s32.totalorder %s304, 0
      %s307 = sadd.s32 %s306, 1
      %s308 = scalar_select %p305, %s306, %s307
      %p311 = pneg %p305
      %p312 = scmp.eq.s32.totalorder %s29, 3
      %p313 = por %p311, %p312
      %p314 = scmp.ne.s32.totalorder %s306, %s309
      %p315 = scmp.eq.s32.totalorder %s29, 0
      %p316 = por %p314, %p315
      %p317 = scmp.ne.s32.totalorder %s306, %s309
      %p318 = scmp.eq.s32.totalorder %s34, 3
      %p319 = por %p317, %p318
      %p320 = scmp.ne.s32.totalorder %s309, %s310
      %p321 = scmp.eq.s32.totalorder %s34, 0
      %p322 = por %p320, %p321
      %p323 = scmp.ne.s32.totalorder %s309, %s310
      %p324 = scmp.eq.s32.totalorder %s35, 3
      %p325 = por %p323, %p324
      %p327 = scmp.ne.s32.totalorder %s310, %s326
      %p328 = scmp.eq.s32.totalorder %s35, 0
      %p329 = por %p327, %p328
      %s330 = ssub.s32 %s37, %s44
      %p331 = scmp.eq.s32.totalorder %s330, 0
      %s333 = sadd.s32 %s332, 1
      %s334 = scalar_select %p331, %s332, %s333
      %p337 = pneg %p331
      %p338 = scmp.eq.s32.totalorder %s29, 3
      %p339 = por %p337, %p338
      %p340 = scmp.ne.s32.totalorder %s332, %s335
      %p341 = scmp.eq.s32.totalorder %s29, 0
      %p342 = por %p340, %p341
      %p343 = scmp.ne.s32.totalorder %s332, %s335
      %p344 = scmp.eq.s32.totalorder %s34, 3
      %p345 = por %p343, %p344
      %p346 = scmp.ne.s32.totalorder %s335, %s336
      %p347 = scmp.eq.s32.totalorder %s34, 0
      %p348 = por %p346, %p347
      %p349 = scmp.ne.s32.totalorder %s335, %s336
      %p350 = scmp.eq.s32.totalorder %s35, 3
      %p351 = por %p349, %p350
      %p353 = scmp.ne.s32.totalorder %s336, %s352
      %p354 = scmp.eq.s32.totalorder %s35, 0
      %p355 = por %p353, %p354
      %s356 = ssub.s32 %s37, %s44
      %p357 = scmp.eq.s32.totalorder %s356, 0
      %s359 = sadd.s32 %s358, 1
      %s360 = scalar_select %p357, %s358, %s359
      %p363 = pneg %p357
      %p364 = scmp.eq.s32.totalorder %s29, 3
      %p365 = por %p363, %p364
      %p366 = scmp.ne.s32.totalorder %s358, %s361
      %p367 = scmp.eq.s32.totalorder %s29, 0
      %p368 = por %p366, %p367
      %p369 = scmp.ne.s32.totalorder %s358, %s361
      %p370 = scmp.eq.s32.totalorder %s34, 3
      %p371 = por %p369, %p370
      %p372 = scmp.ne.s32.totalorder %s361, %s362
      %p373 = scmp.eq.s32.totalorder %s34, 0
      %p374 = por %p372, %p373
      %p375 = scmp.ne.s32.totalorder %s361, %s362
      %p376 = scmp.eq.s32.totalorder %s35, 3
      %p377 = por %p375, %p376
      %p379 = scmp.ne.s32.totalorder %s362, %s378
      %p380 = scmp.eq.s32.totalorder %s35, 0
      %p381 = por %p379, %p380
      %s382 = ssub.s32 %s37, %s44
      %p383 = scmp.eq.s32.totalorder %s382, 0
      %s385 = sadd.s32 %s384, 1
      %s386 = scalar_select %p383, %s384, %s385
      %p389 = pneg %p383
      %p390 = scmp.eq.s32.totalorder %s29, 3
      %p391 = por %p389, %p390
      %p392 = scmp.ne.s32.totalorder %s384, %s387
      %p393 = scmp.eq.s32.totalorder %s29, 0
      %p394 = por %p392, %p393
      %p395 = scmp.ne.s32.totalorder %s384, %s387
      %p396 = scmp.eq.s32.totalorder %s34, 3
      %p397 = por %p395, %p396
      %p398 = scmp.ne.s32.totalorder %s387, %s388
      %p399 = scmp.eq.s32.totalorder %s34, 0
      %p400 = por %p398, %p399
      %p401 = scmp.ne.s32.totalorder %s387, %s388
      %p402 = scmp.eq.s32.totalorder %s35, 3
      %p403 = por %p401, %p402
      %p405 = scmp.ne.s32.totalorder %s388, %s404
      %p406 = scmp.eq.s32.totalorder %s35, 0
      %p407 = por %p405, %p406
      %s409 = sadd.s32 %s408, 1
      %p412 = scmp.eq.s32.totalorder %s29, 3
      %p413 = scmp.ne.s32.totalorder %s408, %s410
      %p414 = scmp.eq.s32.totalorder %s29, 0
      %p415 = por %p413, %p414
      %p416 = scmp.ne.s32.totalorder %s408, %s410
      %p417 = scmp.eq.s32.totalorder %s34, 3
      %p418 = por %p416, %p417
      %p419 = scmp.ne.s32.totalorder %s410, %s411
      %p420 = scmp.eq.s32.totalorder %s34, 0
      %p421 = por %p419, %p420
      %p422 = scmp.ne.s32.totalorder %s410, %s411
      %p423 = scmp.eq.s32.totalorder %s35, 3
      %p424 = por %p422, %p423
      %p426 = scmp.ne.s32.totalorder %s411, %s425
      %p427 = scmp.eq.s32.totalorder %s35, 0
      %p428 = por %p426, %p427
      %s430 = sadd.s32 %s429, 1
      %p433 = scmp.eq.s32.totalorder %s29, 3
      %p434 = scmp.ne.s32.totalorder %s429, %s431
      %p435 = scmp.eq.s32.totalorder %s29, 0
      %p436 = por %p434, %p435
      %p437 = scmp.ne.s32.totalorder %s429, %s431
      %p438 = scmp.eq.s32.totalorder %s34, 3
      %p439 = por %p437, %p438
      %p440 = scmp.ne.s32.totalorder %s431, %s432
      %p441 = scmp.eq.s32.totalorder %s34, 0
      %p442 = por %p440, %p441
      %p443 = scmp.ne.s32.totalorder %s431, %s432
      %p444 = scmp.eq.s32.totalorder %s35, 3
      %p445 = por %p443, %p444
      %p447 = scmp.ne.s32.totalorder %s432, %s446
      %p448 = scmp.eq.s32.totalorder %s35, 0
      %p449 = por %p447, %p448
      %s450 = ssub.s32 %s36, %s48
      %p451 = scmp.eq.s32.totalorder %s450, 0
      %s453 = sadd.s32 %s452, 1
      %s454 = scalar_select %p451, %s452, %s453
      %p457 = pneg %p451
      %p458 = scmp.eq.s32.totalorder %s29, 3
      %p459 = por %p457, %p458
      %p460 = scmp.ne.s32.totalorder %s452, %s455
      %p461 = scmp.eq.s32.totalorder %s29, 0
      %p462 = por %p460, %p461
      %p463 = scmp.ne.s32.totalorder %s452, %s455
      %p464 = scmp.eq.s32.totalorder %s34, 3
      %p465 = por %p463, %p464
      %p466 = scmp.ne.s32.totalorder %s455, %s456
      %p467 = scmp.eq.s32.totalorder %s34, 0
      %p468 = por %p466, %p467
      %p469 = scmp.ne.s32.totalorder %s455, %s456
      %p470 = scmp.eq.s32.totalorder %s35, 3
      %p471 = por %p469, %p470
      %p473 = scmp.ne.s32.totalorder %s456, %s472
      %p474 = scmp.eq.s32.totalorder %s35, 0
      %p475 = por %p473, %p474
      %p476 = scmp.le.s32.totalorder 1, %s29
      %p477 = scmp.lt.s32.totalorder %s29, 5
      %p478 = pnand %p476, %p477
      %p479 = pneg %p478
      // Predicated region
      $region9: #{tpu_custom_call.1} parent=5 // pred_check
        _
      $region10: #{tpu_custom_call.1} parent=5 // pred_check_branch
        %481 = sbr.rel (%p478) target = $region12
      $region11: #{tpu_custom_call.1} parent=5 // pred_region
        %s482 = ssub.s32 %s29, 1
        // Predicated region
        $region13: #{tpu_custom_call.1} parent=11 // pred_check
          %p483 = pneg %p88
        $region14: #{tpu_custom_call.1} parent=11 // pred_check_branch
          %485 = sbr.rel (%p483) target = $region16
        $region15: #{tpu_custom_call.1} parent=11 // pred_region
          %487 = vsyncadd [#allocation7], 0
          %s489 = sshll.u32 %s1, 4
          %s490 = int_to_ptr.hbm [resolvable:$true] %s489
          %s491 = sshll.u32 [#allocation6], 4
          %s492 = int_to_ptr.vmem [resolvable:$true] %s491
          %494 = dma.hbm_to_vmem [thread:$0]  %s490, 128, %s492, [#allocation7]
        $region16: #{tpu_custom_call.1} parent=11 // pred_fallthru
          _
        // Predicated region
        $region17: #{tpu_custom_call.1} parent=11 // pred_check
          %p495 = pneg %p421
        $region18: #{tpu_custom_call.1} parent=11 // pred_check_branch
          %497 = sbr.rel (%p495) target = $region20
        $region19: #{tpu_custom_call.1} parent=11 // pred_region
          _
        $region20: #{tpu_custom_call.1} parent=11 // pred_fallthru
          _
        // Predicated region
        $region21: #{tpu_custom_call.1} parent=11 // pred_check
          %p498 = pneg %p442
        $region22: #{tpu_custom_call.1} parent=11 // pred_check_branch
          %500 = sbr.rel (%p498) target = $region24
        $region23: #{tpu_custom_call.1} parent=11 // pred_region
          _
        $region24: #{tpu_custom_call.1} parent=11 // pred_fallthru
          _
      $region12: #{tpu_custom_call.1} parent=5 // pred_fallthru
        _
      %p501 = scmp.lt.s32.totalorder %s29, 4
      // Predicated region
      $region25: #{tpu_custom_call.1} parent=5 // pred_check
        %p502 = pneg %p501
      $region26: #{tpu_custom_call.1} parent=5 // pred_check_branch
        %504 = sbr.rel (%p502) target = $region28
      $region27: #{tpu_custom_call.1} parent=5 // pred_region
        // Predicated region
        $region29: #{tpu_custom_call.1} parent=27 // pred_check
          %p505 = pneg %p61
        $region30: #{tpu_custom_call.1} parent=27 // pred_check_branch
          %507 = sbr.rel (%p505) target = $region32
        $region31: #{tpu_custom_call.1} parent=27 // pred_region
          %s508 = sand.u32 %s29, 1
          %s509 = scalar_lea.sflag [#allocation4], %s508
          %s510 = sand.u32 %s51, 1
          %s511 = smul.addr %s510, 8
          %s512 = scalar_lea.vmem [#allocation3], %s511
          %514 = vsyncadd %s509, 0
          %s515 = smul.addr %s36, 8
          %s516 = scalar_lea.hbm %s0, %s515
          %s518 = sshll.u32 %s516, 4
          %s519 = int_to_ptr.hbm [resolvable:$true] %s518
          %s520 = sshll.u32 %s512, 4
          %s521 = int_to_ptr.vmem [resolvable:$true] %s520
          %523 = dma.hbm_to_vmem [thread:$0]  %s519, 128, %s521, %s509
        $region32: #{tpu_custom_call.1} parent=27 // pred_fallthru
          _
        // Predicated region
        $region33: #{tpu_custom_call.1} parent=27 // pred_check
          %p524 = pneg %p108
        $region34: #{tpu_custom_call.1} parent=27 // pred_check_branch
          %526 = sbr.rel (%p524) target = $region36
        $region35: #{tpu_custom_call.1} parent=27 // pred_region
          %s527 = sand.u32 %s29, 1
          %s528 = scalar_lea.sflag [#allocation4], %s527
          %s529 = sand.u32 %s98, 1
          %s530 = scalar_lea.vmem [#allocation8], %s529
          %532 = vsyncadd %s528, 0
          %s533 = scalar_lea.hbm %s2, %s37
          %s535 = sshll.u32 %s533, 4
          %s536 = int_to_ptr.hbm [resolvable:$true] %s535
          %s537 = sshll.u32 %s530, 4
          %s538 = int_to_ptr.vmem [resolvable:$true] %s537
          %540 = dma.hbm_to_vmem [thread:$0]  %s536, 16, %s538, %s528
        $region36: #{tpu_custom_call.1} parent=27 // pred_fallthru
          _
        // Predicated region
        $region37: #{tpu_custom_call.1} parent=27 // pred_check
          %p541 = pneg %p134
        $region38: #{tpu_custom_call.1} parent=27 // pred_check_branch
          %543 = sbr.rel (%p541) target = $region40
        $region39: #{tpu_custom_call.1} parent=27 // pred_region
          %p544 = scmp.lt.s32.totalorder %s37, 1
          %s545 = scalar_select %p544, %s37, 1
          %s546 = scalar_lea.vmem %s3, %s545
        $region40: #{tpu_custom_call.1} parent=27 // pred_fallthru
          _
        // Predicated region
        $region41: #{tpu_custom_call.1} parent=27 // pred_check
          %p547 = pneg %p160
        $region42: #{tpu_custom_call.1} parent=27 // pred_check_branch
          %549 = sbr.rel (%p547) target = $region44
        $region43: #{tpu_custom_call.1} parent=27 // pred_region
          %s550 = sand.u32 %s29, 1
          %s551 = scalar_lea.sflag [#allocation4], %s550
          %s552 = sand.u32 %s150, 1
          %s553 = smul.addr %s552, 192
          %s554 = scalar_lea.vmem [#allocation9], %s553
          %556 = vsyncadd %s551, 0
          %s557 = smul.addr %s37, 48
          %s558 = smul.addr %s557, 4
          %s559 = scalar_lea.hbm %s4, %s558
          %s560 = sshll.u32 %s559, 4
          %s561 = int_to_ptr.hbm [resolvable:$true] %s560
          %s562 = sshll.u32 %s554, 4
          %s563 = int_to_ptr.vmem [resolvable:$true] %s562
          %568 = dma.hbm_to_vmem [thread:$0]  %s561, 3072, %s563, %s551, 192, 192, 12
        $region44: #{tpu_custom_call.1} parent=27 // pred_fallthru
          _
        // Predicated region
        $region45: #{tpu_custom_call.1} parent=27 // pred_check
          %p569 = pneg %p186
        $region46: #{tpu_custom_call.1} parent=27 // pred_check_branch
          %571 = sbr.rel (%p569) target = $region48
        $region47: #{tpu_custom_call.1} parent=27 // pred_region
          %s572 = sand.u32 %s29, 1
          %s573 = scalar_lea.sflag [#allocation4], %s572
          %s574 = sand.u32 %s176, 1
          %s575 = smul.addr %s574, 3
          %s576 = scalar_lea.vmem [#allocation10], %s575
          %578 = vsyncadd %s573, 0
          %s579 = smul.addr %s37, 3
          %s580 = scalar_lea.hbm %s5, %s579
          %s582 = sshll.u32 %s580, 4
          %s583 = int_to_ptr.hbm [resolvable:$true] %s582
          %s584 = sshll.u32 %s576, 4
          %s585 = int_to_ptr.vmem [resolvable:$true] %s584
          %587 = dma.hbm_to_vmem [thread:$0]  %s583, 48, %s585, %s573
        $region48: #{tpu_custom_call.1} parent=27 // pred_fallthru
          _
        // Predicated region
        $region49: #{tpu_custom_call.1} parent=27 // pred_check
          %p588 = pneg %p212
        $region50: #{tpu_custom_call.1} parent=27 // pred_check_branch
          %590 = sbr.rel (%p588) target = $region52
        $region51: #{tpu_custom_call.1} parent=27 // pred_region
          %s591 = sand.u32 %s29, 1
          %s592 = scalar_lea.sflag [#allocation4], %s591
          %s593 = sand.u32 %s202, 1
          %s594 = smul.addr %s593, 16
          %s595 = scalar_lea.vmem [#allocation11], %s594
          %597 = vsyncadd %s592, 0
          %s598 = smul.addr %s37, 4
          %s599 = smul.addr %s598, 4
          %s600 = scalar_lea.hbm %s6, %s599
          %s601 = sshll.u32 %s600, 4
          %s602 = int_to_ptr.hbm [resolvable:$true] %s601
          %s603 = sshll.u32 %s595, 4
          %s604 = int_to_ptr.vmem [resolvable:$true] %s603
          %609 = dma.hbm_to_vmem [thread:$0]  %s602, 256, %s604, %s592, 64, 64, 4
        $region52: #{tpu_custom_call.1} parent=27 // pred_fallthru
          _
        // Predicated region
        $region53: #{tpu_custom_call.1} parent=27 // pred_check
          %p610 = pneg %p238
        $region54: #{tpu_custom_call.1} parent=27 // pred_check_branch
          %612 = sbr.rel (%p610) target = $region56
        $region55: #{tpu_custom_call.1} parent=27 // pred_region
          %p613 = scmp.lt.s32.totalorder %s37, 1
          %s614 = scalar_select %p613, %s37, 1
          %s615 = scalar_lea.vmem %s7, %s614
        $region56: #{tpu_custom_call.1} parent=27 // pred_fallthru
          _
        // Predicated region
        $region57: #{tpu_custom_call.1} parent=27 // pred_check
          %p616 = pneg %p264
        $region58: #{tpu_custom_call.1} parent=27 // pred_check_branch
          %618 = sbr.rel (%p616) target = $region60
        $region59: #{tpu_custom_call.1} parent=27 // pred_region
          %p619 = scmp.lt.s32.totalorder %s37, 1
          %s620 = scalar_select %p619, %s37, 1
          %s621 = scalar_lea.vmem %s8, %s620
        $region60: #{tpu_custom_call.1} parent=27 // pred_fallthru
          _
        // Predicated region
        $region61: #{tpu_custom_call.1} parent=27 // pred_check
          %p622 = pneg %p290
        $region62: #{tpu_custom_call.1} parent=27 // pred_check_branch
          %624 = sbr.rel (%p622) target = $region64
        $region63: #{tpu_custom_call.1} parent=27 // pred_region
          %p625 = scmp.lt.s32.totalorder %s37, 1
          %s626 = scalar_select %p625, %s37, 1
          %s627 = scalar_lea.vmem %s9, %s626
        $region64: #{tpu_custom_call.1} parent=27 // pred_fallthru
          _
        // Predicated region
        $region65: #{tpu_custom_call.1} parent=27 // pred_check
          %p628 = pneg %p316
        $region66: #{tpu_custom_call.1} parent=27 // pred_check_branch
          %630 = sbr.rel (%p628) target = $region68
        $region67: #{tpu_custom_call.1} parent=27 // pred_region
          %s631 = sand.u32 %s29, 1
          %s632 = scalar_lea.sflag [#allocation4], %s631
          %s633 = sand.u32 %s306, 1
          %s634 = smul.addr %s633, 64
          %s635 = scalar_lea.vmem [#allocation12], %s634
          %637 = vsyncadd %s632, 0
          %s638 = smul.addr %s37, 16
          %s639 = smul.addr %s638, 4
          %s640 = scalar_lea.hbm %s10, %s639
          %s641 = sshll.u32 %s640, 4
          %s642 = int_to_ptr.hbm [resolvable:$true] %s641
          %s643 = sshll.u32 %s635, 4
          %s644 = int_to_ptr.vmem [resolvable:$true] %s643
          %649 = dma.hbm_to_vmem [thread:$0]  %s642, 1024, %s644, %s632, 64, 64, 4
        $region68: #{tpu_custom_call.1} parent=27 // pred_fallthru
          _
        // Predicated region
        $region69: #{tpu_custom_call.1} parent=27 // pred_check
          %p650 = pneg %p342
        $region70: #{tpu_custom_call.1} parent=27 // pred_check_branch
          %652 = sbr.rel (%p650) target = $region72
        $region71: #{tpu_custom_call.1} parent=27 // pred_region
          %p653 = scmp.lt.s32.totalorder %s37, 1
          %s654 = scalar_select %p653, %s37, 1
          %s655 = scalar_lea.vmem %s11, %s654
        $region72: #{tpu_custom_call.1} parent=27 // pred_fallthru
          _
        // Predicated region
        $region73: #{tpu_custom_call.1} parent=27 // pred_check
          %p656 = pneg %p368
        $region74: #{tpu_custom_call.1} parent=27 // pred_check_branch
          %658 = sbr.rel (%p656) target = $region76
        $region75: #{tpu_custom_call.1} parent=27 // pred_region
          %s659 = sand.u32 %s29, 1
          %s660 = scalar_lea.sflag [#allocation4], %s659
          %s661 = sand.u32 %s358, 1
          %s662 = smul.addr %s661, 64
          %s663 = scalar_lea.vmem [#allocation13], %s662
          %665 = vsyncadd %s660, 0
          %s666 = smul.addr %s37, 16
          %s667 = smul.addr %s666, 4
          %s668 = scalar_lea.hbm %s12, %s667
          %s669 = sshll.u32 %s668, 4
          %s670 = int_to_ptr.hbm [resolvable:$true] %s669
          %s671 = sshll.u32 %s663, 4
          %s672 = int_to_ptr.vmem [resolvable:$true] %s671
          %677 = dma.hbm_to_vmem [thread:$0]  %s670, 1024, %s672, %s660, 64, 64, 4
        $region76: #{tpu_custom_call.1} parent=27 // pred_fallthru
          _
        // Predicated region
        $region77: #{tpu_custom_call.1} parent=27 // pred_check
          %p678 = pneg %p394
        $region78: #{tpu_custom_call.1} parent=27 // pred_check_branch
          %680 = sbr.rel (%p678) target = $region80
        $region79: #{tpu_custom_call.1} parent=27 // pred_region
          %p681 = scmp.lt.s32.totalorder %s37, 1
          %s682 = scalar_select %p681, %s37, 1
          %s683 = scalar_lea.vmem %s13, %s682
        $region80: #{tpu_custom_call.1} parent=27 // pred_fallthru
          _
      $region28: #{tpu_custom_call.1} parent=5 // pred_fallthru
        _
      %p684 = scmp.le.s32.totalorder 1, %s29
      %p685 = scmp.lt.s32.totalorder %s29, 5
      %p686 = pnand %p684, %p685
      %p687 = pneg %p686
      // Predicated region
      $region81: #{tpu_custom_call.1} parent=5 // pred_check
        _
      $region82: #{tpu_custom_call.1} parent=5 // pred_check_branch
        %689 = sbr.rel (%p686) target = $region84
      $region83: #{tpu_custom_call.1} parent=5 // pred_region
        %s690 = ssub.s32 %s29, 1
        %s691 = sand.u32 %s34, 1
        %s692 = scalar_lea.sflag [#allocation4], %s691
        %s693 = sand.u32 %s54, 1
        %s694 = smul.addr %s693, 8
        %s695 = scalar_lea.vmem [#allocation3], %s694
        // Predicated region
        $region85: #{tpu_custom_call.1} parent=83 // pred_check
          %p696 = pneg %p67
        $region86: #{tpu_custom_call.1} parent=83 // pred_check_branch
          %698 = sbr.rel (%p696) target = $region88
        $region87: #{tpu_custom_call.1} parent=83 // pred_region
          %700 = dma.done %s692, 128
        $region88: #{tpu_custom_call.1} parent=83 // pred_fallthru
          _
        // Predicated region
        $region89: #{tpu_custom_call.1} parent=83 // pred_check
          %p701 = pneg %p88
        $region90: #{tpu_custom_call.1} parent=83 // pred_check_branch
          %703 = sbr.rel (%p701) target = $region92
        $region91: #{tpu_custom_call.1} parent=83 // pred_region
          %705 = dma.done [#allocation7], 128
        $region92: #{tpu_custom_call.1} parent=83 // pred_fallthru
          _
        %s706 = sand.u32 %s34, 1
        %s707 = scalar_lea.sflag [#allocation4], %s706
        %s708 = sand.u32 %s101, 1
        %s709 = scalar_lea.vmem [#allocation8], %s708
        // Predicated region
        $region93: #{tpu_custom_call.1} parent=83 // pred_check
          %p710 = pneg %p114
        $region94: #{tpu_custom_call.1} parent=83 // pred_check_branch
          %712 = sbr.rel (%p710) target = $region96
        $region95: #{tpu_custom_call.1} parent=83 // pred_region
          %714 = dma.done %s707, 16
        $region96: #{tpu_custom_call.1} parent=83 // pred_fallthru
          _
        %s715 = sand.u32 %s34, 1
        %s716 = scalar_lea.sflag [#allocation4], %s715
        %s717 = sand.u32 %s153, 1
        %s718 = smul.addr %s717, 192
        %s719 = scalar_lea.vmem [#allocation9], %s718
        // Predicated region
        $region97: #{tpu_custom_call.1} parent=83 // pred_check
          %p720 = pneg %p166
        $region98: #{tpu_custom_call.1} parent=83 // pred_check_branch
          %722 = sbr.rel (%p720) target = $region100
        $region99: #{tpu_custom_call.1} parent=83 // pred_region
          %724 = dma.done %s716, 3072
        $region100: #{tpu_custom_call.1} parent=83 // pred_fallthru
          _
        %s725 = sand.u32 %s34, 1
        %s726 = scalar_lea.sflag [#allocation4], %s725
        %s727 = sand.u32 %s179, 1
        %s728 = smul.addr %s727, 3
        %s729 = scalar_lea.vmem [#allocation10], %s728
        // Predicated region
        $region101: #{tpu_custom_call.1} parent=83 // pred_check
          %p730 = pneg %p192
        $region102: #{tpu_custom_call.1} parent=83 // pred_check_branch
          %732 = sbr.rel (%p730) target = $region104
        $region103: #{tpu_custom_call.1} parent=83 // pred_region
          %734 = dma.done %s726, 48
        $region104: #{tpu_custom_call.1} parent=83 // pred_fallthru
          _
        %s735 = sand.u32 %s34, 1
        %s736 = scalar_lea.sflag [#allocation4], %s735
        %s737 = sand.u32 %s205, 1
        %s738 = smul.addr %s737, 16
        %s739 = scalar_lea.vmem [#allocation11], %s738
        // Predicated region
        $region105: #{tpu_custom_call.1} parent=83 // pred_check
          %p740 = pneg %p218
        $region106: #{tpu_custom_call.1} parent=83 // pred_check_branch
          %742 = sbr.rel (%p740) target = $region108
        $region107: #{tpu_custom_call.1} parent=83 // pred_region
          %744 = dma.done %s736, 256
        $region108: #{tpu_custom_call.1} parent=83 // pred_fallthru
          _
        %s745 = sand.u32 %s34, 1
        %s746 = scalar_lea.sflag [#allocation4], %s745
        %s747 = sand.u32 %s309, 1
        %s748 = smul.addr %s747, 64
        %s749 = scalar_lea.vmem [#allocation12], %s748
        // Predicated region
        $region109: #{tpu_custom_call.1} parent=83 // pred_check
          %p750 = pneg %p322
        $region110: #{tpu_custom_call.1} parent=83 // pred_check_branch
          %752 = sbr.rel (%p750) target = $region112
        $region111: #{tpu_custom_call.1} parent=83 // pred_region
          %754 = dma.done %s746, 1024
        $region112: #{tpu_custom_call.1} parent=83 // pred_fallthru
          _
        %s755 = sand.u32 %s34, 1
        %s756 = scalar_lea.sflag [#allocation4], %s755
        %s757 = sand.u32 %s361, 1
        %s758 = smul.addr %s757, 64
        %s759 = scalar_lea.vmem [#allocation13], %s758
        // Predicated region
        $region113: #{tpu_custom_call.1} parent=83 // pred_check
          %p760 = pneg %p374
        $region114: #{tpu_custom_call.1} parent=83 // pred_check_branch
          %762 = sbr.rel (%p760) target = $region116
        $region115: #{tpu_custom_call.1} parent=83 // pred_region
          %764 = dma.done %s756, 1024
        $region116: #{tpu_custom_call.1} parent=83 // pred_fallthru
          _
        %s765 = sand.u32 %s34, 1
        %s766 = scalar_lea.sflag [#allocation4], %s765
        %s767 = sand.u32 %s54, 1
        %s768 = smul.addr %s767, 8
        %s769 = scalar_lea.vmem [#allocation3], %s768
        %p770 = pneg %p67
        %p771 = pneg %p64
        %p772 = pneg %p88
        %p773 = pneg %p85
        %s774 = sand.u32 %s34, 1
        %s775 = scalar_lea.sflag [#allocation4], %s774
        %s776 = sand.u32 %s101, 1
        %s777 = scalar_lea.vmem [#allocation8], %s776
        %p778 = pneg %p114
        %p779 = pneg %p111
        %p780 = scmp.lt.s32.totalorder %s39, 1
        %s781 = scalar_select %p780, %s39, 1
        %s782 = scalar_lea.vmem %s3, %s781
        %p783 = pneg %p140
        %p784 = pneg %p137
        %s785 = sand.u32 %s34, 1
        %s786 = scalar_lea.sflag [#allocation4], %s785
        %s787 = sand.u32 %s153, 1
        %s788 = smul.addr %s787, 192
        %s789 = scalar_lea.vmem [#allocation9], %s788
        %p790 = pneg %p166
        %p791 = pneg %p163
        %s792 = sand.u32 %s34, 1
        %s793 = scalar_lea.sflag [#allocation4], %s792
        %s794 = sand.u32 %s179, 1
        %s795 = smul.addr %s794, 3
        %s796 = scalar_lea.vmem [#allocation10], %s795
        %p797 = pneg %p192
        %p798 = pneg %p189
        %s799 = sand.u32 %s34, 1
        %s800 = scalar_lea.sflag [#allocation4], %s799
        %s801 = sand.u32 %s205, 1
        %s802 = smul.addr %s801, 16
        %s803 = scalar_lea.vmem [#allocation11], %s802
        %p804 = pneg %p218
        %p805 = pneg %p215
        %p806 = scmp.lt.s32.totalorder %s39, 1
        %s807 = scalar_select %p806, %s39, 1
        %s808 = scalar_lea.vmem %s7, %s807
        %p809 = pneg %p244
        %p810 = pneg %p241
        %p811 = scmp.lt.s32.totalorder %s39, 1
        %s812 = scalar_select %p811, %s39, 1
        %s813 = scalar_lea.vmem %s8, %s812
        %p814 = pneg %p270
        %p815 = pneg %p267
        %p816 = scmp.lt.s32.totalorder %s39, 1
        %s817 = scalar_select %p816, %s39, 1
        %s818 = scalar_lea.vmem %s9, %s817
        %p819 = pneg %p296
        %p820 = pneg %p293
        %s821 = sand.u32 %s34, 1
        %s822 = scalar_lea.sflag [#allocation4], %s821
        %s823 = sand.u32 %s309, 1
        %s824 = smul.addr %s823, 64
        %s825 = scalar_lea.vmem [#allocation12], %s824
        %p826 = pneg %p322
        %p827 = pneg %p319
        %p828 = scmp.lt.s32.totalorder %s39, 1
        %s829 = scalar_select %p828, %s39, 1
        %s830 = scalar_lea.vmem %s11, %s829
        %p831 = pneg %p348
        %p832 = pneg %p345
        %s833 = sand.u32 %s34, 1
        %s834 = scalar_lea.sflag [#allocation4], %s833
        %s835 = sand.u32 %s361, 1
        %s836 = smul.addr %s835, 64
        %s837 = scalar_lea.vmem [#allocation13], %s836
        %p838 = pneg %p374
        %p839 = pneg %p371
        %p840 = scmp.lt.s32.totalorder %s39, 1
        %s841 = scalar_select %p840, %s39, 1
        %s842 = scalar_lea.vmem %s13, %s841
        %p843 = pneg %p400
        %p844 = pneg %p397
        %p845 = pneg %p421
        %p846 = pneg %p418
        %p847 = pneg %p442
        %p848 = pneg %p439
        %p849 = pneg %p468
        %p850 = pneg %p465
        %s851 = sand.u32 %s455, 1
        %s852 = scalar_lea.sflag [#allocation5], %s851
        %s853 = sand.u32 %s455, 1
        %s854 = smul.addr %s853, 8
        %s855 = scalar_lea.vmem [#allocation14], %s854
        %p856 = scmp.lt.s32.totalorder %s39, 1
        %s857 = scalar_select %p856, %s39, 1
        %s858 = scalar_lea.vmem %s3, %s857
        %p859 = scmp.lt.s32.totalorder %s39, 1
        %s860 = scalar_select %p859, %s39, 1
        %s861 = scalar_lea.vmem %s7, %s860
        %p862 = scmp.lt.s32.totalorder %s39, 1
        %s863 = scalar_select %p862, %s39, 1
        %s864 = scalar_lea.vmem %s8, %s863
        %p865 = scmp.lt.s32.totalorder %s39, 1
        %s866 = scalar_select %p865, %s39, 1
        %s867 = scalar_lea.vmem %s9, %s866
        %p868 = scmp.lt.s32.totalorder %s39, 1
        %s869 = scalar_select %p868, %s39, 1
        %s870 = scalar_lea.vmem %s11, %s869
        %p871 = scmp.lt.s32.totalorder %s39, 1
        %s872 = scalar_select %p871, %s39, 1
        %s873 = scalar_lea.vmem %s13, %s872
        %p875 = scmp.eq.s32.totalorder %s39, 0
        // Predicated region
        $region117: #{tpu_custom_call.1} parent=83 // pred_check
          %p876 = pneg %p875
        $region118: #{tpu_custom_call.1} parent=83 // pred_check_branch
          %878 = sbr.rel (%p876) target = $region120
        $region119: #{tpu_custom_call.1} parent=83 // pred_region
          %v879 = vld [vmem:[%s695] sm:$0xff]
          %880 = vst [vmem:[#allocation2] sm:$0xff] %v879
        $region120: #{tpu_custom_call.1} parent=83 // pred_fallthru
          _
        %v881 = vld [vmem:[#allocation2] sm:$0xff]
        %v882 = vld [vmem:[#allocation6] sm:$0xff]
        %v883 = vld [vmem:[%s709] sm:$0x1]
        %v884 = vld [vmem:[%s858] sm:$0x1]
        %885 = vadd.xlane.f32.xlu0 %v881
        %v886 = vpop.xlane.xlu0 %885
        %v887 = vmul.f32 %v881, %v881
        %888 = vadd.xlane.f32.xlu0 %v887
        %v889 = vpop.xlane.xlu0 %888
        %v890 = vmul.f32 %v886, 0.03125
        %v891 = vmul.f32 %v889, 0.03125
        %v892 = vmul.f32 %v890, %v890
        %v893 = vsub.f32 %v891, %v892
        %v894 = vadd.f32 %v893, 1e-05
        %v895 = vrsqrt.pop %v894
        %v896 = vmul.f32 %v895, %v894
        %v897 = vmul.f32 %v896, %v895
        %v898 = vmul.f32 0.5, %v897
        %v899 = vsub.f32 1.5, %v898
        %v900 = vmul.f32 %v895, %v899
        %vm901 = vweird.f32 %v894
        %vm902 = vweird.f32 %v895
        %vm903 = vmor %vm901, %vm902
        %v904 = vsel %vm903, %v895, %v900
        %v905 = vsub.f32 %v881, %v890
        %v906 = vmul.f32 %v905, %v904
        %v908 = vperm.slane %v883, 0
        %v910 = vmul.f32 %v906, %v908
        %v912 = vperm.slane %v884, 0
        %v914 = vadd.f32 %v910, %v912
        %v915 = vpack.c.bf16 %v914, %v914
        %v916 = vld [vmem:[%s719] sm:$0xff]
        %v917 = vld [vmem:[%s719 + $0x8] sm:$0xf]
        %v918 = vld [vmem:[%s719 + $0xc] sm:$0xff]
        %v919 = vld [vmem:[%s719 + $0x14] sm:$0xf]
        %v920 = vld [vmem:[%s719 + $0x18] sm:$0xff]
        %v921 = vld [vmem:[%s719 + $0x20] sm:$0xf]
        %v922 = vld [vmem:[%s719 + $0x24] sm:$0xff]
        %v923 = vld [vmem:[%s719 + $0x2c] sm:$0xf]
        %v924 = vld [vmem:[%s719 + $0x30] sm:$0xff]
        %v925 = vld [vmem:[%s719 + $0x38] sm:$0xf]
        %v926 = vld [vmem:[%s719 + $0x3c] sm:$0xff]
        %v927 = vld [vmem:[%s719 + $0x44] sm:$0xf]
        %v928 = vld [vmem:[%s719 + $0x48] sm:$0xff]
        %v929 = vld [vmem:[%s719 + $0x50] sm:$0xf]
        %v930 = vld [vmem:[%s719 + $0x54] sm:$0xff]
        %v931 = vld [vmem:[%s719 + $0x5c] sm:$0xf]
        %v932 = vld [vmem:[%s719 + $0x60] sm:$0xff]
        %v933 = vld [vmem:[%s719 + $0x68] sm:$0xf]
        %v934 = vld [vmem:[%s719 + $0x6c] sm:$0xff]
        %v935 = vld [vmem:[%s719 + $0x74] sm:$0xf]
        %v936 = vld [vmem:[%s719 + $0x78] sm:$0xff]
        %v937 = vld [vmem:[%s719 + $0x80] sm:$0xf]
        %v938 = vld [vmem:[%s719 + $0x84] sm:$0xff]
        %v939 = vld [vmem:[%s719 + $0x8c] sm:$0xf]
        %v940 = vld [vmem:[%s719 + $0x90] sm:$0xff]
        %v941 = vld [vmem:[%s719 + $0x98] sm:$0xf]
        %v942 = vld [vmem:[%s719 + $0x9c] sm:$0xff]
        %v943 = vld [vmem:[%s719 + $0xa4] sm:$0xf]
        %v944 = vld [vmem:[%s719 + $0xa8] sm:$0xff]
        %v945 = vld [vmem:[%s719 + $0xb0] sm:$0xf]
        %v946 = vld [vmem:[%s719 + $0xb4] sm:$0xff]
        %v947 = vld [vmem:[%s719 + $0xbc] sm:$0xf]
        %v948 = vld [vmem:[%s729] sm:$0x7]
        %v950 = vperm.slane %v948, 0
        %v951 = vperm.slane %v948, 1
        %v952 = vperm.slane %v948, 2
        %v988 = vunpack.c.l.b16 %v916
        %v989 = vunpack.c.h.b16 %v916
        %v990 = vunpack.c.l.b16 %v917
        %v991 = vunpack.c.l.b16 %v918
        %v992 = vunpack.c.h.b16 %v918
        %v993 = vunpack.c.l.b16 %v919
        %v994 = vunpack.c.l.b16 %v920
        %v995 = vunpack.c.h.b16 %v920
        %v996 = vunpack.c.l.b16 %v921
        %v997 = vunpack.c.l.b16 %v922
        %v998 = vunpack.c.h.b16 %v922
        %v999 = vunpack.c.l.b16 %v923
        %v1000 = vunpack.c.l.b16 %v924
        %v1001 = vunpack.c.h.b16 %v924
        %v1002 = vunpack.c.l.b16 %v925
        %v1003 = vunpack.c.l.b16 %v926
        %v1004 = vunpack.c.h.b16 %v926
        %v1005 = vunpack.c.l.b16 %v927
        %v1006 = vunpack.c.l.b16 %v928
        %v1007 = vunpack.c.h.b16 %v928
        %v1008 = vunpack.c.l.b16 %v929
        %v1009 = vunpack.c.l.b16 %v930
        %v1010 = vunpack.c.h.b16 %v930
        %v1011 = vunpack.c.l.b16 %v931
        %v1012 = vunpack.c.l.b16 %v932
        %v1013 = vunpack.c.h.b16 %v932
        %v1014 = vunpack.c.l.b16 %v933
        %v1015 = vunpack.c.l.b16 %v934
        %v1016 = vunpack.c.h.b16 %v934
        %v1017 = vunpack.c.l.b16 %v935
        %v1018 = vunpack.c.l.b16 %v936
        %v1019 = vunpack.c.h.b16 %v936
        %v1020 = vunpack.c.l.b16 %v937
        %v1021 = vunpack.c.l.b16 %v938
        %v1022 = vunpack.c.h.b16 %v938
        %v1023 = vunpack.c.l.b16 %v939
        %v1024 = vunpack.c.l.b16 %v940
        %v1025 = vunpack.c.h.b16 %v940
        %v1026 = vunpack.c.l.b16 %v941
        %v1027 = vunpack.c.l.b16 %v942
        %v1028 = vunpack.c.h.b16 %v942
        %v1029 = vunpack.c.l.b16 %v943
        %v1030 = vunpack.c.l.b16 %v944
        %v1031 = vunpack.c.h.b16 %v944
        %v1032 = vunpack.c.l.b16 %v945
        %v1033 = vunpack.c.l.b16 %v946
        %v1034 = vunpack.c.h.b16 %v946
        %v1035 = vunpack.c.l.b16 %v947
        %v1036 = vpack.c.b16 %v991, %v988
        %v1037 = vpack.c.b16 %v992, %v989
        %v1038 = vpack.c.b16 %v993, %v990
        %v1039 = vpack.c.b16 %v997, %v994
        %v1040 = vpack.c.b16 %v998, %v995
        %v1041 = vpack.c.b16 %v999, %v996
        %v1042 = vpack.c.b16 %v1003, %v1000
        %v1043 = vpack.c.b16 %v1004, %v1001
        %v1044 = vpack.c.b16 %v1005, %v1002
        %v1045 = vpack.c.b16 %v1009, %v1006
        %v1046 = vpack.c.b16 %v1010, %v1007
        %v1047 = vpack.c.b16 %v1011, %v1008
        %v1048 = vpack.c.b16 %v1015, %v1012
        %v1049 = vpack.c.b16 %v1016, %v1013
        %v1050 = vpack.c.b16 %v1017, %v1014
        %v1051 = vpack.c.b16 %v1021, %v1018
        %v1052 = vpack.c.b16 %v1022, %v1019
        %v1053 = vpack.c.b16 %v1023, %v1020
        %v1054 = vpack.c.b16 %v1027, %v1024
        %v1055 = vpack.c.b16 %v1028, %v1025
        %v1056 = vpack.c.b16 %v1029, %v1026
        %v1057 = vpack.c.b16 %v1033, %v1030
        %v1058 = vpack.c.b16 %v1034, %v1031
        %v1059 = vpack.c.b16 %v1035, %v1032
        %1084 = vmatpush.bf16.msra.mxu0 %v1057
        %1085 = vmatpush.bf16.msra.mxu0 %v1054
        %1086 = vmatpush.bf16.msra.mxu0 %v1051
        %1087 = vmatpush.bf16.msra.mxu0 %v1048
        %1088 = vmatpush.bf16.msra.mxu0 %v1045
        %1089 = vmatpush.bf16.msra.mxu0 %v1042
        %1090 = vmatpush.bf16.msra.mxu0 %v1039
        %1091 = vmatpush.bf16.msra.mxu0 %v1036
        %1092 = vmatmul.bf16.gmra.mxu0 %v915
        %v1093 = vpop.f32.mrf.mxu0
        %v1094 = vadd.f32 %v950, %v1093
        %v1095 = vpop.f32.mrf.mxu0
        %1096 = vdwg.mxu0
        %1097 = vmatpush.bf16.msra.mxu0 %v1058
        %1098 = vmatpush.bf16.msra.mxu0 %v1055
        %1099 = vmatpush.bf16.msra.mxu0 %v1052
        %1100 = vmatpush.bf16.msra.mxu0 %v1049
        %1101 = vmatpush.bf16.msra.mxu0 %v1046
        %1102 = vmatpush.bf16.msra.mxu0 %v1043
        %1103 = vmatpush.bf16.msra.mxu0 %v1040
        %1104 = vmatpush.bf16.msra.mxu0 %v1037
        %1105 = vmatmul.bf16.gmra.mxu0 %v915
        %v1106 = vpop.f32.mrf.mxu0
        %v1107 = vadd.f32 %v951, %v1106
        %v1108 = vpop.f32.mrf.mxu0
        %1109 = vdwg.mxu0
        %1110 = vmatpush.bf16.msra.mxu0 %v1059
        %1111 = vmatpush.bf16.msra.mxu0 %v1056
        %1112 = vmatpush.bf16.msra.mxu0 %v1053
        %1113 = vmatpush.bf16.msra.mxu0 %v1050
        %1114 = vmatpush.bf16.msra.mxu0 %v1047
        %1115 = vmatpush.bf16.msra.mxu0 %v1044
        %1116 = vmatpush.bf16.msra.mxu0 %v1041
        %1117 = vmatpush.bf16.msra.mxu0 %v1038
        %1118 = vmatmul.bf16.gmra.mxu0 %v915
        %v1119 = vpop.f32.mrf.mxu0
        %v1120 = vadd.f32 %v952, %v1119
        %v1121 = vpop.f32.mrf.mxu0
        %1122 = vdwg.mxu0
        %v1123 = vpack.c.bf16 %v1094, %v1094
        %v1124 = vpack.c.bf16 %v1107, %v1107
        %v1125 = vpack.c.bf16 %v1120, %v1120
        %vm1126 = vcmask 130048
        %v1128 = vsel %vm1126, %v1123, 0
        %v1131 = vsel %vm1126, %v1124, 0
        %1133 = vmatpush.bf16.xpose.msra.mxu0 0
        %1134 = vmatpush.bf16.xpose.msra.mxu0 0
        %1135 = vmatpush.bf16.xpose.msra.mxu0 0
        %1136 = vmatpush.bf16.xpose.msra.mxu0 0
        %1137 = vmatpush.bf16.xpose.msra.mxu0 0
        %1138 = vmatpush.bf16.xpose.msra.mxu0 0
        %1139 = vmatpush.bf16.xpose.msra.mxu0 0
        %1140 = vmatpush.bf16.xpose.msra.mxu0 %v1131
        %1141 = vmatmul.bf16.gmra.mxu0 %v1128
        %v1142 = vpop.f32.mrf.mxu0
        %v1143 = vadd.f32 %v882, %v1142
        %v1144 = vpop.f32.mrf.mxu0
        %1145 = vdwg.mxu0
        %vm1146 = vcmask 64512
        %v1147 = vsel %vm1146, %v1143, -inf
        %1148 = vmax.xlane.f32.xlu0 %v1147
        %v1149 = vpop.xlane.xlu0 %1148
        %v1150 = vsub.f32 %v1143, %v1149
        %v1151 = vmul.f32 %v1150, 1.442695
        %v1152 = vpow.pop %v1151
        %v1153 = vsel %vm1146, %v1152, 0.0
        %1154 = vadd.xlane.f32.xlu0 %v1153
        %v1155 = vpop.xlane.xlu0 %1154
        %v1156 = vrcp.pop %v1155
        %v1157 = vmul.f32 %v1155, %v1156
        %v1158 = vsub.f32 1.0, %v1157
        %v1159 = vmul.f32 %v1156, %v1158
        %v1160 = vadd.f32 %v1156, %v1159
        %vm1161 = vweird.f32 %v1155
        %vm1162 = vweird.f32 %v1156
        %vm1163 = vmor %vm1161, %vm1162
        %v1164 = vsel %vm1163, %v1156, %v1160
        %v1165 = vand.u32 2147483647, %v1155
        %vm1166 = vcmp.eq.f32.partialorder %v1165, 8.507059e+37
        %v1167 = vand.u32 %v1155, 2147483648
        %v1168 = vor.u32 1.1754944e-38, %v1167
        %v1169 = vsel %vm1166, %v1168, %v1164
        %v1170 = vmul.f32 %v1152, %v1169
        %v1171 = vpack.c.bf16 %v1170, %v1170
        %v1173 = vsel %vm1146, %v1171, 0
        %vm1175 = vcmask 1043456
        %v1177 = vsel %vm1175, %v1125, 0
        %1179 = vmatpush.bf16.msra.mxu0 0
        %1180 = vmatpush.bf16.msra.mxu0 0
        %1181 = vmatpush.bf16.msra.mxu0 0
        %1182 = vmatpush.bf16.msra.mxu0 0
        %1183 = vmatpush.bf16.msra.mxu0 0
        %1184 = vmatpush.bf16.msra.mxu0 0
        %1185 = vmatpush.bf16.msra.mxu0 0
        %1186 = vmatpush.bf16.msra.mxu0 %v1177
        %1187 = vmatmul.bf16.gmra.mxu0 %v1173
        %v1188 = vpop.f32.mrf.mxu0
        %v1189 = vadd.f32 0.0, %v1188
        %v1190 = vpop.f32.mrf.mxu0
        %1191 = vdwg.mxu0
        %v1193 = vunpack.c.l.b16 %v1123
        %v1194 = vpack.c.b16 %v1193, %v1193
        %1195 = vrot.lane.b32.xlu0 %v1194, 112
        %v1196 = vpop.permute.xlu0 %1195
        %v1198 = vunpack.c.l.b16 %v1124
        %v1199 = vpack.c.b16 %v1198, %v1198
        %1200 = vrot.lane.b32.xlu0 %v1199, 112
        %v1201 = vpop.permute.xlu0 %1200
        %v1203 = vsel %vm1126, %v1196, 0
        %v1206 = vsel %vm1126, %v1201, 0
        %1208 = vmatpush.bf16.xpose.msra.mxu0 0
        %1209 = vmatpush.bf16.xpose.msra.mxu0 0
        %1210 = vmatpush.bf16.xpose.msra.mxu0 0
        %1211 = vmatpush.bf16.xpose.msra.mxu0 0
        %1212 = vmatpush.bf16.xpose.msra.mxu0 0
        %1213 = vmatpush.bf16.xpose.msra.mxu0 0
        %1214 = vmatpush.bf16.xpose.msra.mxu0 0
        %1215 = vmatpush.bf16.xpose.msra.mxu0 %v1206
        %1216 = vmatmul.bf16.gmra.mxu0 %v1203
        %v1217 = vpop.f32.mrf.mxu0
        %v1218 = vadd.f32 %v882, %v1217
        %v1219 = vpop.f32.mrf.mxu0
        %1220 = vdwg.mxu0
        %v1221 = vsel %vm1146, %v1218, -inf
        %1222 = vmax.xlane.f32.xlu0 %v1221
        %v1223 = vpop.xlane.xlu0 %1222
        %v1224 = vsub.f32 %v1218, %v1223
        %v1225 = vmul.f32 %v1224, 1.442695
        %v1226 = vpow.pop %v1225
        %v1227 = vsel %vm1146, %v1226, 0.0
        %1228 = vadd.xlane.f32.xlu0 %v1227
        %v1229 = vpop.xlane.xlu0 %1228
        %v1230 = vrcp.pop %v1229
        %v1231 = vmul.f32 %v1229, %v1230
        %v1232 = vsub.f32 1.0, %v1231
        %v1233 = vmul.f32 %v1230, %v1232
        %v1234 = vadd.f32 %v1230, %v1233
        %vm1235 = vweird.f32 %v1229
        %vm1236 = vweird.f32 %v1230
        %vm1237 = vmor %vm1235, %vm1236
        %v1238 = vsel %vm1237, %v1230, %v1234
        %v1239 = vand.u32 2147483647, %v1229
        %vm1240 = vcmp.eq.f32.partialorder %v1239, 8.507059e+37
        %v1241 = vand.u32 %v1229, 2147483648
        %v1242 = vor.u32 1.1754944e-38, %v1241
        %v1243 = vsel %vm1240, %v1242, %v1238
        %v1244 = vmul.f32 %v1226, %v1243
        %v1245 = vpack.c.bf16 %v1244, %v1244
        %v1247 = vunpack.c.l.b16 %v1125
        %v1248 = vpack.c.b16 %v1247, %v1247
        %1249 = vrot.lane.b32.xlu0 %v1248, 112
        %v1250 = vpop.permute.xlu0 %1249
        %v1252 = vsel %vm1146, %v1245, 0
        %v1255 = vsel %vm1175, %v1250, 0
        %1257 = vmatpush.bf16.msra.mxu0 0
        %1258 = vmatpush.bf16.msra.mxu0 0
        %1259 = vmatpush.bf16.msra.mxu0 0
        %1260 = vmatpush.bf16.msra.mxu0 0
        %1261 = vmatpush.bf16.msra.mxu0 0
        %1262 = vmatpush.bf16.msra.mxu0 0
        %1263 = vmatpush.bf16.msra.mxu0 0
        %1264 = vmatpush.bf16.msra.mxu0 %v1255
        %1265 = vmatmul.bf16.gmra.mxu0 %v1252
        %v1266 = vpop.f32.mrf.mxu0
        %v1267 = vadd.f32 0.0, %v1266
        %v1268 = vpop.f32.mrf.mxu0
        %1269 = vdwg.mxu0
        %1271 = vrot.lane.b32.xlu0 %v1267, 16
        %v1272 = vpop.permute.xlu0 %1271
        %v1274 = vsel %vm1126, %v1189, %v1272
        %v1275 = vpack.c.bf16 %v1274, %v1274
        %v1276 = vld [vmem:[%s739] sm:$0xf]
        %v1277 = vld [vmem:[%s739 + $0x4] sm:$0xf]
        %v1278 = vld [vmem:[%s739 + $0x8] sm:$0xf]
        %v1279 = vld [vmem:[%s739 + $0xc] sm:$0xf]
        %v1280 = vld [vmem:[%s861] sm:$0x1]
        %v1282 = vperm.slane %v1280, 0
        %v1288 = vunpack.c.l.b16 %v1276
        %v1289 = vunpack.c.l.b16 %v1277
        %v1290 = vunpack.c.l.b16 %v1278
        %v1291 = vunpack.c.l.b16 %v1279
        %v1292 = vpack.c.b16 %v1289, %v1288
        %v1293 = vpack.c.b16 %v1291, %v1290
        %vm1296 = vcmask 261120
        %v1298 = vsel %vm1296, %v1275, 0
        %1300 = vmatpush.bf16.msra.mxu0 0
        %1301 = vmatpush.bf16.msra.mxu0 0
        %1302 = vmatpush.bf16.msra.mxu0 0
        %1303 = vmatpush.bf16.msra.mxu0 0
        %1304 = vmatpush.bf16.msra.mxu0 0
        %1305 = vmatpush.bf16.msra.mxu0 0
        %1306 = vmatpush.bf16.msra.mxu0 %v1293
        %1307 = vmatpush.bf16.msra.mxu0 %v1292
        %1308 = vmatmul.bf16.gmra.mxu0 %v1298
        %v1309 = vpop.f32.mrf.mxu0
        %v1310 = vadd.f32 %v1282, %v1309
        %v1311 = vpop.f32.mrf.mxu0
        %1312 = vdwg.mxu0
        %v1313 = vadd.f32 %v881, %v1310
        %v1314 = vld [vmem:[%s864] sm:$0x1]
        %v1315 = vld [vmem:[%s867] sm:$0x1]
        %1316 = vadd.xlane.f32.xlu0 %v1313
        %v1317 = vpop.xlane.xlu0 %1316
        %v1318 = vmul.f32 %v1313, %v1313
        %1319 = vadd.xlane.f32.xlu0 %v1318
        %v1320 = vpop.xlane.xlu0 %1319
        %v1321 = vmul.f32 %v1317, 0.03125
        %v1322 = vmul.f32 %v1320, 0.03125
        %v1323 = vmul.f32 %v1321, %v1321
        %v1324 = vsub.f32 %v1322, %v1323
        %v1325 = vadd.f32 %v1324, 1e-05
        %v1326 = vrsqrt.pop %v1325
        %v1327 = vmul.f32 %v1326, %v1325
        %v1328 = vmul.f32 %v1327, %v1326
        %v1329 = vmul.f32 0.5, %v1328
        %v1330 = vsub.f32 1.5, %v1329
        %v1331 = vmul.f32 %v1326, %v1330
        %vm1332 = vweird.f32 %v1325
        %vm1333 = vweird.f32 %v1326
        %vm1334 = vmor %vm1332, %vm1333
        %v1335 = vsel %vm1334, %v1326, %v1331
        %v1336 = vsub.f32 %v1313, %v1321
        %v1337 = vmul.f32 %v1336, %v1335
        %v1339 = vperm.slane %v1314, 0
        %v1341 = vmul.f32 %v1337, %v1339
        %v1343 = vperm.slane %v1315, 0
        %v1345 = vadd.f32 %v1341, %v1343
        %v1346 = vpack.c.bf16 %v1345, %v1345
        %v1347 = vld [vmem:[%s749] sm:$0xf]
        %v1348 = vld [vmem:[%s749 + $0x4] sm:$0xf]
        %v1349 = vld [vmem:[%s749 + $0x8] sm:$0xf]
        %v1350 = vld [vmem:[%s749 + $0xc] sm:$0xf]
        %v1351 = vld [vmem:[%s749 + $0x10] sm:$0xf]
        %v1352 = vld [vmem:[%s749 + $0x14] sm:$0xf]
        %v1353 = vld [vmem:[%s749 + $0x18] sm:$0xf]
        %v1354 = vld [vmem:[%s749 + $0x1c] sm:$0xf]
        %v1355 = vld [vmem:[%s749 + $0x20] sm:$0xf]
        %v1356 = vld [vmem:[%s749 + $0x24] sm:$0xf]
        %v1357 = vld [vmem:[%s749 + $0x28] sm:$0xf]
        %v1358 = vld [vmem:[%s749 + $0x2c] sm:$0xf]
        %v1359 = vld [vmem:[%s749 + $0x30] sm:$0xf]
        %v1360 = vld [vmem:[%s749 + $0x34] sm:$0xf]
        %v1361 = vld [vmem:[%s749 + $0x38] sm:$0xf]
        %v1362 = vld [vmem:[%s749 + $0x3c] sm:$0xf]
        %v1363 = vld [vmem:[%s870] sm:$0x1]
        %v1365 = vperm.slane %v1363, 0
        %v1383 = vunpack.c.l.b16 %v1347
        %v1384 = vunpack.c.l.b16 %v1348
        %v1385 = vunpack.c.l.b16 %v1349
        %v1386 = vunpack.c.l.b16 %v1350
        %v1387 = vunpack.c.l.b16 %v1351
        %v1388 = vunpack.c.l.b16 %v1352
        %v1389 = vunpack.c.l.b16 %v1353
        %v1390 = vunpack.c.l.b16 %v1354
        %v1391 = vunpack.c.l.b16 %v1355
        %v1392 = vunpack.c.l.b16 %v1356
        %v1393 = vunpack.c.l.b16 %v1357
        %v1394 = vunpack.c.l.b16 %v1358
        %v1395 = vunpack.c.l.b16 %v1359
        %v1396 = vunpack.c.l.b16 %v1360
        %v1397 = vunpack.c.l.b16 %v1361
        %v1398 = vunpack.c.l.b16 %v1362
        %v1399 = vpack.c.b16 %v1384, %v1383
        %v1400 = vpack.c.b16 %v1386, %v1385
        %v1401 = vpack.c.b16 %v1388, %v1387
        %v1402 = vpack.c.b16 %v1390, %v1389
        %v1403 = vpack.c.b16 %v1392, %v1391
        %v1404 = vpack.c.b16 %v1394, %v1393
        %v1405 = vpack.c.b16 %v1396, %v1395
        %v1406 = vpack.c.b16 %v1398, %v1397
        %1415 = vmatpush.bf16.msra.mxu0 %v1406
        %1416 = vmatpush.bf16.msra.mxu0 %v1405
        %1417 = vmatpush.bf16.msra.mxu0 %v1404
        %1418 = vmatpush.bf16.msra.mxu0 %v1403
        %1419 = vmatpush.bf16.msra.mxu0 %v1402
        %1420 = vmatpush.bf16.msra.mxu0 %v1401
        %1421 = vmatpush.bf16.msra.mxu0 %v1400
        %1422 = vmatpush.bf16.msra.mxu0 %v1399
        %1423 = vmatmul.bf16.gmra.mxu0 %v1346
        %v1424 = vpop.f32.mrf.mxu0
        %v1425 = vadd.f32 %v1365, %v1424
        %v1426 = vpop.f32.mrf.mxu0
        %1427 = vdwg.mxu0
        %v1428 = vmax.f32 %v1425, 0.0
        %v1429 = vpack.c.bf16 %v1428, %v1428
        %v1430 = vld [vmem:[%s759] sm:$0xf]
        %v1431 = vld [vmem:[%s759 + $0x4] sm:$0xf]
        %v1432 = vld [vmem:[%s759 + $0x8] sm:$0xf]
        %v1433 = vld [vmem:[%s759 + $0xc] sm:$0xf]
        %v1434 = vld [vmem:[%s759 + $0x10] sm:$0xf]
        %v1435 = vld [vmem:[%s759 + $0x14] sm:$0xf]
        %v1436 = vld [vmem:[%s759 + $0x18] sm:$0xf]
        %v1437 = vld [vmem:[%s759 + $0x1c] sm:$0xf]
        %v1438 = vld [vmem:[%s759 + $0x20] sm:$0xf]
        %v1439 = vld [vmem:[%s759 + $0x24] sm:$0xf]
        %v1440 = vld [vmem:[%s759 + $0x28] sm:$0xf]
        %v1441 = vld [vmem:[%s759 + $0x2c] sm:$0xf]
        %v1442 = vld [vmem:[%s759 + $0x30] sm:$0xf]
        %v1443 = vld [vmem:[%s759 + $0x34] sm:$0xf]
        %v1444 = vld [vmem:[%s759 + $0x38] sm:$0xf]
        %v1445 = vld [vmem:[%s759 + $0x3c] sm:$0xf]
        %v1446 = vld [vmem:[%s873] sm:$0x1]
        %v1448 = vperm.slane %v1446, 0
        %v1466 = vunpack.c.l.b16 %v1430
        %v1467 = vunpack.c.l.b16 %v1431
        %v1468 = vunpack.c.l.b16 %v1432
        %v1469 = vunpack.c.l.b16 %v1433
        %v1470 = vunpack.c.l.b16 %v1434
        %v1471 = vunpack.c.l.b16 %v1435
        %v1472 = vunpack.c.l.b16 %v1436
        %v1473 = vunpack.c.l.b16 %v1437
        %v1474 = vunpack.c.l.b16 %v1438
        %v1475 = vunpack.c.l.b16 %v1439
        %v1476 = vunpack.c.l.b16 %v1440
        %v1477 = vunpack.c.l.b16 %v1441
        %v1478 = vunpack.c.l.b16 %v1442
        %v1479 = vunpack.c.l.b16 %v1443
        %v1480 = vunpack.c.l.b16 %v1444
        %v1481 = vunpack.c.l.b16 %v1445
        %v1482 = vpack.c.b16 %v1467, %v1466
        %v1483 = vpack.c.b16 %v1469, %v1468
        %v1484 = vpack.c.b16 %v1471, %v1470
        %v1485 = vpack.c.b16 %v1473, %v1472
        %v1486 = vpack.c.b16 %v1475, %v1474
        %v1487 = vpack.c.b16 %v1477, %v1476
        %v1488 = vpack.c.b16 %v1479, %v1478
        %v1489 = vpack.c.b16 %v1481, %v1480
        %1498 = vmatpush.bf16.msra.mxu0 %v1489
        %1499 = vmatpush.bf16.msra.mxu0 %v1488
        %1500 = vmatpush.bf16.msra.mxu0 %v1487
        %1501 = vmatpush.bf16.msra.mxu0 %v1486
        %1502 = vmatpush.bf16.msra.mxu0 %v1485
        %1503 = vmatpush.bf16.msra.mxu0 %v1484
        %1504 = vmatpush.bf16.msra.mxu0 %v1483
        %1505 = vmatpush.bf16.msra.mxu0 %v1482
        %1506 = vmatmul.bf16.gmra.mxu0 %v1429
        %v1507 = vpop.f32.mrf.mxu0
        %v1508 = vadd.f32 %v1448, %v1507
        %v1509 = vpop.f32.mrf.mxu0
        %1510 = vdwg.mxu0
        %v1511 = vadd.f32 %v1313, %v1508
        %1512 = vst [vmem:[#allocation2] sm:$0xff] %v1511
        %p1513 = scmp.eq.s32.totalorder %s39, 1
        // Predicated region
        $region121: #{tpu_custom_call.1} parent=83 // pred_check
          %p1514 = pneg %p1513
        $region122: #{tpu_custom_call.1} parent=83 // pred_check_branch
          %1516 = sbr.rel (%p1514) target = $region124
        $region123: #{tpu_custom_call.1} parent=83 // pred_region
          %v1517 = vld [vmem:[%s14] sm:$0x1]
          %v1518 = vld [vmem:[%s15] sm:$0x1]
          %1519 = vadd.xlane.f32.xlu0 %v1511
          %v1520 = vpop.xlane.xlu0 %1519
          %v1521 = vmul.f32 %v1511, %v1511
          %1522 = vadd.xlane.f32.xlu0 %v1521
          %v1523 = vpop.xlane.xlu0 %1522
          %v1524 = vmul.f32 %v1520, 0.03125
          %v1525 = vmul.f32 %v1523, 0.03125
          %v1526 = vmul.f32 %v1524, %v1524
          %v1527 = vsub.f32 %v1525, %v1526
          %v1528 = vadd.f32 %v1527, 1e-05
          %v1529 = vrsqrt.pop %v1528
          %v1530 = vmul.f32 %v1529, %v1528
          %v1531 = vmul.f32 %v1530, %v1529
          %v1532 = vmul.f32 0.5, %v1531
          %v1533 = vsub.f32 1.5, %v1532
          %v1534 = vmul.f32 %v1529, %v1533
          %vm1535 = vweird.f32 %v1528
          %vm1536 = vweird.f32 %v1529
          %vm1537 = vmor %vm1535, %vm1536
          %v1538 = vsel %vm1537, %v1529, %v1534
          %v1539 = vsub.f32 %v1511, %v1524
          %v1540 = vmul.f32 %v1539, %v1538
          %v1542 = vperm.slane %v1517, 0
          %v1544 = vmul.f32 %v1540, %v1542
          %v1546 = vperm.slane %v1518, 0
          %v1548 = vadd.f32 %v1544, %v1546
          %1549 = vst [vmem:[%s855] sm:$0xff] %v1548
        $region124: #{tpu_custom_call.1} parent=83 // pred_fallthru
          _
        %s1550 = sand.u32 %s455, 1
        %s1551 = scalar_lea.sflag [#allocation5], %s1550
        %s1552 = sand.u32 %s455, 1
        %s1553 = smul.addr %s1552, 8
        %s1554 = scalar_lea.vmem [#allocation14], %s1553
        // Predicated region
        $region125: #{tpu_custom_call.1} parent=83 // pred_check
          %p1555 = pneg %p465
        $region126: #{tpu_custom_call.1} parent=83 // pred_check_branch
          %1557 = sbr.rel (%p1555) target = $region128
        $region127: #{tpu_custom_call.1} parent=83 // pred_region
          %1559 = vsyncadd %s1551, 0
          %s1560 = smul.addr %s38, 8
          %s1561 = scalar_lea.hbm %s16, %s1560
          %s1563 = sshll.u32 %s1554, 4
          %s1564 = int_to_ptr.vmem [resolvable:$true] %s1563
          %s1565 = sshll.u32 %s1561, 4
          %s1566 = int_to_ptr.hbm [resolvable:$true] %s1565
          %1568 = dma.vmem_to_hbm [thread:$0]  %s1564, 128, %s1566, %s1551
        $region128: #{tpu_custom_call.1} parent=83 // pred_fallthru
          _
      $region84: #{tpu_custom_call.1} parent=5 // pred_fallthru
        _
      %p1569 = scmp.le.s32.totalorder 2, %s29
      // Predicated region
      $region129: #{tpu_custom_call.1} parent=5 // pred_check
        %p1570 = pneg %p1569
      $region130: #{tpu_custom_call.1} parent=5 // pred_check_branch
        %1572 = sbr.rel (%p1570) target = $region132
      $region131: #{tpu_custom_call.1} parent=5 // pred_region
        %s1573 = ssub.s32 %s29, 2
        // Predicated region
        $region133: #{tpu_custom_call.1} parent=131 // pred_check
          %p1574 = pneg %p471
        $region134: #{tpu_custom_call.1} parent=131 // pred_check_branch
          %1576 = sbr.rel (%p1574) target = $region136
        $region135: #{tpu_custom_call.1} parent=131 // pred_region
          %s1577 = sand.u32 %s456, 1
          %s1578 = scalar_lea.sflag [#allocation5], %s1577
          %s1579 = sand.u32 %s456, 1
          %s1580 = smul.addr %s1579, 8
          %s1581 = scalar_lea.vmem [#allocation14], %s1580
          %1583 = dma.done %s1578, 128
        $region136: #{tpu_custom_call.1} parent=131 // pred_fallthru
          _
      $region132: #{tpu_custom_call.1} parent=5 // pred_fallthru
        _
    $region6: #{tpu_custom_call.1} parent=1 // loop_footer
      %s33 = sadd.s32 1, %s29
    $region7: #{tpu_custom_call.1} parent=1 // loop_footer_branch
      %28 = sbr.rel target = $region3
    $region8: #{tpu_custom_call.1} parent=1 // loop_exit
      _
    %1584 = vsyncpa [#allocation4], 1
    %s1585 = scalar_lea.sflag [#allocation4], 1
    %1586 = vsyncpa %s1585, 1
    %1587 = vsyncpa [#allocation7], 1
    %1588 = vsyncpa [#allocation5], 1
    %s1589 = scalar_lea.sflag [#allocation5], 1
    %1590 = vsyncpa %s1589, 1

</llo_original>
